<compile_context>
chip_gen: v7x
topology: tpu7x:2x2x1
jax: 0.10.0
libtpu: 0.0.40
codegen_flags: <defaults>
</compile_context>

<pallas_src>
import jax
import jax.numpy as jnp
from jax.experimental import pallas as pl
from jax.experimental.pallas import tpu as pltpu

NEG_INF = -1e30
MAX_BATCH_BLOCK = 128          # cap on rows per grid block (VMEM / M target)
VMEM_LIMIT = 32 * 1024 * 1024  # explicit scoped VMEM limit (>= v5e 16MiB
                               # default, <= v7x 64MiB physical)


def _choose_batch_block(batch):
    """Rows per grid block: ~half the batch (so nb >= 2 for v7x's 2 TCs when
    batch >= 16), rounded up to a sublane multiple, capped at 128 so the
    per-block context / pre-gate scratch stays comfortably inside VMEM."""
    half = -(-batch // 2)
    bb = -(-half // 8) * 8
    return max(8, min(MAX_BATCH_BLOCK, bb))


# ----------------------------------------------------------------------------
# Fused encoder + attention-decoder kernel: one invocation per batch block.
# ----------------------------------------------------------------------------
def seq2seq_kernel(blkmax_ref,                               # scalar prefetch (SMEM)
                   x_ref, y_ref, len_ref,                    # activations / lengths
                   ew_ih_ref, ew_hh_ref, eb_ref,             # encoder LSTM weights
                   dw_ih_ref, dw_hh_ref, db_ref,             # decoder LSTM weights
                   wa_t_ref, wc_ref,                         # attention weights
                   out_ref,                                  # (Td, BB, H) output
                   ctx_ref, ctxp_ref, pge_ref, pgd_ref):     # VMEM scratch
    Ts, BB, E = x_ref.shape
    Td = y_ref.shape[0]
    H = ew_hh_ref.shape[0]
    H4 = 4 * H

    # ---- hoisted input projections: one big M = T*BB matmul each ------------
    pge = jnp.dot(x_ref[...].reshape(Ts * BB, E).astype(jnp.bfloat16),
                  ew_ih_ref[...], preferred_element_type=jnp.float32) + eb_ref[...]
    pge_ref[...] = pge.reshape(Ts, BB, H4)
    pgd = jnp.dot(y_ref[...].reshape(Td * BB, E).astype(jnp.bfloat16),
                  dw_ih_ref[...], preferred_element_type=jnp.float32) + db_ref[...]
    pgd_ref[...] = pgd.reshape(Td, BB, H4)

    # Zero contexts so timesteps beyond this block's max length stay clean
    # (they are additionally masked out of the attention below).
    ctx_ref[...] = jnp.zeros_like(ctx_ref)

    lens = len_ref[...]                                      # (BB, 1) int32

    # ---- encoder recurrence: only h @ W_hh on the serial path ---------------
    def enc_step(t, carry):
        h, c = carry                                         # (BB, H) f32
        gates = pge_ref[t] + jnp.dot(h.astype(jnp.bfloat16), ew_hh_ref[...],
                                     preferred_element_type=jnp.float32)
        i = jax.nn.sigmoid(gates[:, 0 * H:1 * H])
        f = jax.nn.sigmoid(gates[:, 1 * H:2 * H])
        g = jnp.tanh(gates[:, 2 * H:3 * H])
        o = jax.nn.sigmoid(gates[:, 3 * H:4 * H])
        c_new = f * c + i * g
        h_new = o * jnp.tanh(c_new)
        # pack_padded_sequence semantics: freeze state past each length,
        # zero context at padded positions.
        m = (t < lens).astype(jnp.float32)                   # (BB, 1)
        h = m * h_new + (1.0 - m) * h
        c = m * c_new + (1.0 - m) * c
        ctx_ref[t] = m * h_new
        return (h, c)

    t_max = blkmax_ref[pl.program_id(0)]   # skip fully-padded source timesteps
    h0 = jnp.zeros((BB, H), jnp.float32)
    c0 = jnp.zeros((BB, H), jnp.float32)
    h, c = jax.lax.fori_loop(0, t_max, enc_step, (h0, c0))

    # ---- hoisted Luong "general" projection of all contexts -----------------
    ctxp = jnp.dot(ctx_ref[...].reshape(Ts * BB, H).astype(jnp.bfloat16),
                   wa_t_ref[...], preferred_element_type=jnp.float32)
    ctxp_ref[...] = ctxp.reshape(Ts, BB, H)

    # ---- decoder recurrence with attention (state carried from encoder) -----
    def dec_step(t, carry):
        h, c = carry
        gates = pgd_ref[t] + jnp.dot(h.astype(jnp.bfloat16), dw_hh_ref[...],
                                     preferred_element_type=jnp.float32)
        i = jax.nn.sigmoid(gates[:, 0 * H:1 * H])
        f = jax.nn.sigmoid(gates[:, 1 * H:2 * H])
        g = jnp.tanh(gates[:, 2 * H:3 * H])
        o = jax.nn.sigmoid(gates[:, 3 * H:4 * H])
        c_new = f * c + i * g
        h_new = o * jnp.tanh(c_new)

        # score[t,b] = h_new[b] . (Wa ctx[t,b]) -- VPU multiply + lane reduce.
        scores_tb = jnp.sum(ctxp_ref[...] * h_new[None, :, :], axis=-1)   # (Ts, BB)

        # Softmax over source time in lane-dense batch-major (BB, Ts) layout;
        # padded source positions get an additive -1e30 bias.
        t_pos = jax.lax.broadcasted_iota(jnp.int32, (BB, Ts), 1)
        bias = jnp.where(t_pos < lens, 0.0, NEG_INF)                      # (BB, Ts)
        scores = scores_tb.T + bias                                       # (BB, Ts)
        smax = jnp.max(scores, axis=-1, keepdims=True)
        p = jnp.exp(scores - smax)
        alpha = p * pl.reciprocal(jnp.sum(p, axis=-1, keepdims=True), approx=True)

        weighted = jnp.sum(ctx_ref[...] * alpha.T[:, :, None], axis=0)    # (BB, H)

        # tanh(Wc [weighted ; h_new]) as one (BB, 2H) x (2H, H) matmul.
        cat = jnp.concatenate([weighted, h_new], axis=-1).astype(jnp.bfloat16)
        out = jnp.tanh(jnp.dot(cat, wc_ref[...], preferred_element_type=jnp.float32))
        out_ref[t] = out.astype(out_ref.dtype)
        return (h_new, c_new)

    jax.lax.fori_loop(0, Td, dec_step, (h, c))


def run_seq2seq(blk_max, x_emb, y_emb, len_col,
                ew_ih, ew_hh, eb, dw_ih, dw_hh, db, wa_t, wc, bb):
    Ts, Bp, E = x_emb.shape
    Td = y_emb.shape[0]
    H = ew_hh.shape[0]
    assert E % 128 == 0 and H % 128 == 0, "emb/hidden dims must be lane multiples"
    assert Bp % bb == 0
    nb = Bp // bb
    H4 = 4 * H
    # Constant-index weight specs: Pallas detects the unchanged block index and
    # does not re-DMA them across grid steps.  (Single-buffering them via
    # pl.Buffered(1) would further halve their VMEM footprint at large H.)
    return pl.pallas_call(
        seq2seq_kernel,
        out_shape=jax.ShapeDtypeStruct((Td, Bp, H), jnp.float32),
        grid_spec=pltpu.PrefetchScalarGridSpec(
            num_scalar_prefetch=1,
            grid=(nb,),
            in_specs=[
                pl.BlockSpec((Ts, bb, E), lambda bi, mx: (0, bi, 0)),   # x_emb
                pl.BlockSpec((Td, bb, E), lambda bi, mx: (0, bi, 0)),   # y_emb
                pl.BlockSpec((bb, 1),     lambda bi, mx: (bi, 0)),      # lengths
                pl.BlockSpec((E, H4),     lambda bi, mx: (0, 0)),       # enc W_ih
                pl.BlockSpec((H, H4),     lambda bi, mx: (0, 0)),       # enc W_hh
                pl.BlockSpec((1, H4),     lambda bi, mx: (0, 0)),       # enc bias
                pl.BlockSpec((E, H4),     lambda bi, mx: (0, 0)),       # dec W_ih
                pl.BlockSpec((H, H4),     lambda bi, mx: (0, 0)),       # dec W_hh
                pl.BlockSpec((1, H4),     lambda bi, mx: (0, 0)),       # dec bias
                pl.BlockSpec((H, H),      lambda bi, mx: (0, 0)),       # Wa^T
                pl.BlockSpec((2 * H, H),  lambda bi, mx: (0, 0)),       # Wc
            ],
            out_specs=pl.BlockSpec((Td, bb, H), lambda bi, mx: (0, bi, 0)),
            scratch_shapes=[
                pltpu.VMEM((Ts, bb, H), jnp.float32),    # contexts
                pltpu.VMEM((Ts, bb, H), jnp.float32),    # Wa-projected contexts
                pltpu.VMEM((Ts, bb, H4), jnp.float32),   # encoder pre-gates
                pltpu.VMEM((Td, bb, H4), jnp.float32),   # decoder pre-gates
            ]),
        compiler_params=pltpu.CompilerParams(
            dimension_semantics=("parallel",),
            vmem_limit_bytes=VMEM_LIMIT),
    )(blk_max, x_emb, y_emb, len_col, ew_ih, ew_hh, eb, dw_ih, dw_hh, db, wa_t, wc)


# ----------------------------------------------------------------------------
# seq2seq.forward equivalent
# ----------------------------------------------------------------------------
def seq2seq_forward(src, src_len, tgt, params):
    # lengths, indices = torch.sort(src_len.squeeze(0), descending=True)
    # (the reference forward() keeps the sorted order; only sample() un-sorts)
    lens = src_len[0]
    indices = jnp.argsort(-lens)
    lengths = lens[indices]
    src = src[:, indices]
    tgt = tgt[:, indices]

    T_src, B = src.shape
    bb = _choose_batch_block(B)
    Bp = ((B + bb - 1) // bb) * bb
    pad = Bp - B
    if pad:
        src = jnp.pad(src, ((0, 0), (0, pad)))
        tgt = jnp.pad(tgt, ((0, 0), (0, pad)))
        lengths = jnp.pad(lengths, (0, pad))       # padded rows get length 0
    nb = Bp // bb

    # TODO(synk): fuse the embedding gathers into the kernel (in-kernel DMA row
    # gather from HBM tables, directly in bf16) to avoid this HBM round trip.
    x_emb = jnp.take(params['src_emb'], src, axis=0)          # (Ts, Bp, E) f32
    y_emb = jnp.take(params['tgt_emb'], tgt[:-1], axis=0)     # (Td, Bp, E) f32

    len_col = lengths.astype(jnp.int32)[:, None]              # (Bp, 1)
    # Per-block max source length (scalar prefetch) -- batch is sorted
    # descending, so short blocks skip their padded timesteps.
    blk_max = jnp.max(len_col[:, 0].reshape(nb, bb), axis=1).astype(jnp.int32)

    bf16 = jnp.bfloat16
    wc = jnp.concatenate([params['att_wc1'], params['att_wc2']],
                         axis=0).astype(bf16)                 # (2H, H)

    outputs = run_seq2seq(
        blk_max, x_emb, y_emb, len_col,
        params['enc_w_ih'].astype(bf16), params['enc_w_hh'].astype(bf16),
        params['enc_b'],
        params['dec_w_ih'].astype(bf16), params['dec_w_hh'].astype(bf16),
        params['dec_b'],
        params['att_wa'].T.astype(bf16), wc, bb)

    return outputs[:, :B], tgt[1:, :B]


def init_params(key, src_vocab, tgt_vocab, emb, hidden):
    ks = jax.random.split(key, 10)
    s = 0.1
    return {
        'src_emb':  s * jax.random.normal(ks[0], (src_vocab, emb), jnp.float32),
        'tgt_emb':  s * jax.random.normal(ks[1], (tgt_vocab, emb), jnp.float32),
        'enc_w_ih': s * jax.random.normal(ks[2], (emb, 4 * hidden), jnp.float32),
        'enc_w_hh': s * jax.random.normal(ks[3], (hidden, 4 * hidden), jnp.float32),
        'enc_b':    jnp.zeros((1, 4 * hidden), jnp.float32),   # merged b_ih + b_hh
        'dec_w_ih': s * jax.random.normal(ks[4], (emb, 4 * hidden), jnp.float32),
        'dec_w_hh': s * jax.random.normal(ks[5], (hidden, 4 * hidden), jnp.float32),
        'dec_b':    jnp.zeros((1, 4 * hidden), jnp.float32),
        'att_wa':   s * jax.random.normal(ks[6], (hidden, hidden), jnp.float32),
        'att_wc1':  s * jax.random.normal(ks[7], (hidden, hidden), jnp.float32),
        'att_wc2':  s * jax.random.normal(ks[8], (hidden, hidden), jnp.float32),
    }


if __name__ == "__main__":
    SRC_VOCAB, TGT_VOCAB = 20, 20
    EMB, HID = 128, 128          # lane-aligned feature dims
    B, T_SRC, T_TGT = 4, 8, 7    # batch padded to a sublane multiple inside

    key = jax.random.PRNGKey(0)
    kp, k1, k2, k3 = jax.random.split(key, 4)
    params = init_params(kp, SRC_VOCAB, TGT_VOCAB, EMB, HID)

    src = jax.random.randint(k1, (T_SRC, B), 0, SRC_VOCAB, dtype=jnp.int32)
    tgt = jax.random.randint(k2, (T_TGT, B), 0, TGT_VOCAB, dtype=jnp.int32)
    src_len = jax.random.randint(k3, (1, B), 3, T_SRC + 1, dtype=jnp.int32)

    outputs, shifted_tgt = jax.jit(seq2seq_forward)(src, src_len, tgt, params)
    jax.block_until_ready(outputs)
    jax.block_until_ready(shifted_tgt)

    assert outputs.shape == (T_TGT - 1, B, HID)
    assert shifted_tgt.shape == (T_TGT - 1, B)
    assert bool(jnp.all(jnp.isfinite(outputs)))
    print("KERNEL_OK")
</pallas_src>

<mosaic_0001>
module attributes {stable_mosaic.version = 11 : i64} {
  func.func @seq2seq_kernel(%arg0: i32, %arg1: memref<1xi32, #tpu.memory_space<smem>>, %arg2: memref<8x8x128xf32, #tpu.memory_space<vmem>>, %arg3: memref<6x8x128xf32, #tpu.memory_space<vmem>>, %arg4: memref<8x1xi32, #tpu.memory_space<vmem>>, %arg5: memref<128x512xbf16, #tpu.memory_space<vmem>>, %arg6: memref<128x512xbf16, #tpu.memory_space<vmem>>, %arg7: memref<1x512xf32, #tpu.memory_space<vmem>>, %arg8: memref<128x512xbf16, #tpu.memory_space<vmem>>, %arg9: memref<128x512xbf16, #tpu.memory_space<vmem>>, %arg10: memref<1x512xf32, #tpu.memory_space<vmem>>, %arg11: memref<128x128xbf16, #tpu.memory_space<vmem>>, %arg12: memref<256x128xbf16, #tpu.memory_space<vmem>>, %arg13: memref<6x8x128xf32, #tpu.memory_space<vmem>>, %arg14: memref<8x8x128xf32, #tpu.memory_space<vmem>>, %arg15: memref<8x8x128xf32, #tpu.memory_space<vmem>>, %arg16: memref<8x8x512xf32, #tpu.memory_space<vmem>>, %arg17: memref<6x8x512xf32, #tpu.memory_space<vmem>>) attributes {dimension_semantics = [#tpu.dimension_semantics<parallel>], iteration_bounds = array<i64: 1>, scalar_prefetch = 1 : i64, scratch_operands = 4 : i64, tpu.core_type = #tpu.core_type<tc>, window_params = [{transform_indices = @transform_0, window_bounds = array<i64: 8, 8, 128>}, {transform_indices = @transform_1, window_bounds = array<i64: 6, 8, 128>}, {transform_indices = @transform_2, window_bounds = array<i64: 8, 1>}, {pipeline_mode = #tpu.pipeline_mode<synchronous>, transform_indices = @transform_3, window_bounds = array<i64: 128, 512>}, {pipeline_mode = #tpu.pipeline_mode<synchronous>, transform_indices = @transform_4, window_bounds = array<i64: 128, 512>}, {pipeline_mode = #tpu.pipeline_mode<synchronous>, transform_indices = @transform_5, window_bounds = array<i64: 1, 512>}, {pipeline_mode = #tpu.pipeline_mode<synchronous>, transform_indices = @transform_6, window_bounds = array<i64: 128, 512>}, {pipeline_mode = #tpu.pipeline_mode<synchronous>, transform_indices = @transform_7, window_bounds = array<i64: 128, 512>}, {pipeline_mode = #tpu.pipeline_mode<synchronous>, transform_indices = @transform_8, window_bounds = array<i64: 1, 512>}, {pipeline_mode = #tpu.pipeline_mode<synchronous>, transform_indices = @transform_9, window_bounds = array<i64: 128, 128>}, {pipeline_mode = #tpu.pipeline_mode<synchronous>, transform_indices = @transform_10, window_bounds = array<i64: 256, 128>}, {transform_indices = @transform_11, window_bounds = array<i64: 6, 8, 128>}]} {
    %c0 = arith.constant 0 : index
    %c0_0 = arith.constant 0 : index
    %c0_1 = arith.constant 0 : index
    %0 = vector.load %arg2[%c0, %c0_0, %c0_1] : memref<8x8x128xf32, #tpu.memory_space<vmem>>, vector<8x8x128xf32>
    %1 = vector.shape_cast %0 : vector<8x8x128xf32> to vector<64x128xf32>
    %2 = arith.truncf %1 : vector<64x128xf32> to vector<64x128xbf16>
    %c0_2 = arith.constant 0 : index
    %c0_3 = arith.constant 0 : index
    %3 = vector.load %arg5[%c0_2, %c0_3] : memref<128x512xbf16, #tpu.memory_space<vmem>>, vector<128x512xbf16>
    %cst = arith.constant dense<0.000000e+00> : vector<64x512xf32>
    %4 = tpu.matmul %2, %3, %cst {dimension_numbers = #tpu.dot_dimension_numbers<[1], [0], [0], [1], [0, 0, 1, 1], [], []>} : vector<64x128xbf16>, vector<128x512xbf16>, vector<64x512xf32> -> vector<64x512xf32>
    %c0_4 = arith.constant 0 : index
    %c0_5 = arith.constant 0 : index
    %5 = vector.load %arg7[%c0_4, %c0_5] : memref<1x512xf32, #tpu.memory_space<vmem>>, vector<1x512xf32>
    %6 = vector.broadcast %5 : vector<1x512xf32> to vector<64x512xf32>
    %7 = arith.addf %4, %6 : vector<64x512xf32>
    %8 = vector.shape_cast %7 : vector<64x512xf32> to vector<8x8x512xf32>
    %c0_6 = arith.constant 0 : index
    %c0_7 = arith.constant 0 : index
    %c0_8 = arith.constant 0 : index
    %9 = vector.load %arg16[%c0_6, %c0_7, %c0_8] : memref<8x8x512xf32, #tpu.memory_space<vmem>>, vector<8x8x512xf32>
    tpu.vector_store %arg16[%c0_6, %c0_7, %c0_8], %8 {strides = array<i32>} : memref<8x8x512xf32, #tpu.memory_space<vmem>>, vector<8x8x512xf32>,
    %c0_9 = arith.constant 0 : index
    %c0_10 = arith.constant 0 : index
    %c0_11 = arith.constant 0 : index
    %10 = vector.load %arg3[%c0_9, %c0_10, %c0_11] : memref<6x8x128xf32, #tpu.memory_space<vmem>>, vector<6x8x128xf32>
    %11 = vector.shape_cast %10 : vector<6x8x128xf32> to vector<48x128xf32>
    %12 = arith.truncf %11 : vector<48x128xf32> to vector<48x128xbf16>
    %c0_12 = arith.constant 0 : index
    %c0_13 = arith.constant 0 : index
    %13 = vector.load %arg8[%c0_12, %c0_13] : memref<128x512xbf16, #tpu.memory_space<vmem>>, vector<128x512xbf16>
    %cst_14 = arith.constant dense<0.000000e+00> : vector<48x512xf32>
    %14 = tpu.matmul %12, %13, %cst_14 {dimension_numbers = #tpu.dot_dimension_numbers<[1], [0], [0], [1], [0, 0, 1, 1], [], []>} : vector<48x128xbf16>, vector<128x512xbf16>, vector<48x512xf32> -> vector<48x512xf32>
    %c0_15 = arith.constant 0 : index
    %c0_16 = arith.constant 0 : index
    %15 = vector.load %arg10[%c0_15, %c0_16] : memref<1x512xf32, #tpu.memory_space<vmem>>, vector<1x512xf32>
    %16 = vector.broadcast %15 : vector<1x512xf32> to vector<48x512xf32>
    %17 = arith.addf %14, %16 : vector<48x512xf32>
    %18 = vector.shape_cast %17 : vector<48x512xf32> to vector<6x8x512xf32>
    %c0_17 = arith.constant 0 : index
    %c0_18 = arith.constant 0 : index
    %c0_19 = arith.constant 0 : index
    %19 = vector.load %arg17[%c0_17, %c0_18, %c0_19] : memref<6x8x512xf32, #tpu.memory_space<vmem>>, vector<6x8x512xf32>
    tpu.vector_store %arg17[%c0_17, %c0_18, %c0_19], %18 {strides = array<i32>} : memref<6x8x512xf32, #tpu.memory_space<vmem>>, vector<6x8x512xf32>,
    %cst_20 = arith.constant 0.000000e+00 : f32
    %20 = vector.broadcast %cst_20 : f32 to vector<8x8x128xf32>
    %c0_21 = arith.constant 0 : index
    %c0_22 = arith.constant 0 : index
    %c0_23 = arith.constant 0 : index
    %21 = vector.load %arg14[%c0_21, %c0_22, %c0_23] : memref<8x8x128xf32, #tpu.memory_space<vmem>>, vector<8x8x128xf32>
    tpu.vector_store %arg14[%c0_21, %c0_22, %c0_23], %20 {strides = array<i32>} : memref<8x8x128xf32, #tpu.memory_space<vmem>>, vector<8x8x128xf32>,
    %c0_24 = arith.constant 0 : index
    %c0_25 = arith.constant 0 : index
    %22 = vector.load %arg4[%c0_24, %c0_25] : memref<8x1xi32, #tpu.memory_space<vmem>>, vector<8x1xi32>
    %23 = arith.index_cast %arg0 : i32 to index
    %24 = memref.load %arg1[%23] : memref<1xi32, #tpu.memory_space<smem>>
    %cst_26 = arith.constant 0.000000e+00 : f32
    %25 = vector.broadcast %cst_26 : f32 to vector<8x128xf32>
    %cst_27 = arith.constant 0.000000e+00 : f32
    %26 = vector.broadcast %cst_27 : f32 to vector<8x128xf32>
    %c0_i32 = arith.constant 0 : i32
    %27 = arith.subi %24, %c0_i32 : i32
    %28 = arith.addi %c0_i32, %27 : i32
    %c1_i32 = arith.constant 1 : i32
    %29:2 = scf.for %arg18 = %c0_i32 to %28 step %c1_i32 iter_args(%arg19 = %25, %arg20 = %26) -> (vector<8x128xf32>, vector<8x128xf32>)  : i32 {
      %39 = arith.index_cast %arg18 : i32 to index
      %c0_40 = arith.constant 0 : index
      %c0_41 = arith.constant 0 : index
      %40 = vector.load %arg16[%39, %c0_40, %c0_41] : memref<8x8x512xf32, #tpu.memory_space<vmem>>, vector<1x8x512xf32>
      %41 = vector.shape_cast %40 : vector<1x8x512xf32> to vector<8x512xf32>
      %42 = arith.truncf %arg19 : vector<8x128xf32> to vector<8x128xbf16>
      %c0_42 = arith.constant 0 : index
      %c0_43 = arith.constant 0 : index
      %43 = vector.load %arg6[%c0_42, %c0_43] : memref<128x512xbf16, #tpu.memory_space<vmem>>, vector<128x512xbf16>
      %cst_44 = arith.constant dense<0.000000e+00> : vector<8x512xf32>
      %44 = tpu.matmul %42, %43, %cst_44 {dimension_numbers = #tpu.dot_dimension_numbers<[1], [0], [0], [1], [0, 0, 1, 1], [], []>} : vector<8x128xbf16>, vector<128x512xbf16>, vector<8x512xf32> -> vector<8x512xf32>
      %45 = arith.addf %41, %44 : vector<8x512xf32>
      %46 = vector.extract_strided_slice %45 {offsets = [0, 0], sizes = [8, 128], strides = [1, 1]} : vector<8x512xf32> to vector<8x128xf32>
      %47 = arith.negf %46 : vector<8x128xf32>
      %48 = math.exp %47 : vector<8x128xf32>
      %cst_45 = arith.constant 1.000000e+00 : f32
      %49 = vector.broadcast %cst_45 : f32 to vector<8x128xf32>
      %50 = arith.addf %49, %48 : vector<8x128xf32>
      %51 = arith.divf %49, %50 : vector<8x128xf32>
      %52 = vector.extract_strided_slice %45 {offsets = [0, 128], sizes = [8, 128], strides = [1, 1]} : vector<8x512xf32> to vector<8x128xf32>
      %53 = arith.negf %52 : vector<8x128xf32>
      %54 = math.exp %53 : vector<8x128xf32>
      %cst_46 = arith.constant 1.000000e+00 : f32
      %55 = vector.broadcast %cst_46 : f32 to vector<8x128xf32>
      %56 = arith.addf %55, %54 : vector<8x128xf32>
      %57 = arith.divf %55, %56 : vector<8x128xf32>
      %58 = vector.extract_strided_slice %45 {offsets = [0, 256], sizes = [8, 128], strides = [1, 1]} : vector<8x512xf32> to vector<8x128xf32>
      %59 = math.tanh %58 : vector<8x128xf32>
      %60 = vector.extract_strided_slice %45 {offsets = [0, 384], sizes = [8, 128], strides = [1, 1]} : vector<8x512xf32> to vector<8x128xf32>
      %61 = arith.negf %60 : vector<8x128xf32>
      %62 = math.exp %61 : vector<8x128xf32>
      %cst_47 = arith.constant 1.000000e+00 : f32
      %63 = vector.broadcast %cst_47 : f32 to vector<8x128xf32>
      %64 = arith.addf %63, %62 : vector<8x128xf32>
      %65 = arith.divf %63, %64 : vector<8x128xf32>
      %66 = arith.mulf %57, %arg20 : vector<8x128xf32>
      %67 = arith.mulf %51, %59 : vector<8x128xf32>
      %68 = arith.addf %66, %67 : vector<8x128xf32>
      %69 = math.tanh %68 : vector<8x128xf32>
      %70 = arith.mulf %65, %69 : vector<8x128xf32>
      %71 = vector.broadcast %arg18 : i32 to vector<8x1xi32>
      %72 = arith.cmpi slt, %71, %22 : vector<8x1xi32>
      %73 = arith.extui %72 : vector<8x1xi1> to vector<8x1xi32>
      %74 = arith.sitofp %73 : vector<8x1xi32> to vector<8x1xf32>
      %75 = vector.broadcast %74 : vector<8x1xf32> to vector<8x128xf32>
      %76 = arith.mulf %75, %70 : vector<8x128xf32>
      %cst_48 = arith.constant 1.000000e+00 : f32
      %77 = vector.broadcast %cst_48 : f32 to vector<8x1xf32>
      %78 = arith.subf %77, %74 : vector<8x1xf32>
      %79 = vector.broadcast %78 : vector<8x1xf32> to vector<8x128xf32>
      %80 = arith.mulf %79, %arg19 : vector<8x128xf32>
      %81 = arith.addf %76, %80 : vector<8x128xf32>
      %82 = vector.broadcast %74 : vector<8x1xf32> to vector<8x128xf32>
      %83 = arith.mulf %82, %68 : vector<8x128xf32>
      %cst_49 = arith.constant 1.000000e+00 : f32
      %84 = vector.broadcast %cst_49 : f32 to vector<8x1xf32>
      %85 = arith.subf %84, %74 : vector<8x1xf32>
      %86 = vector.broadcast %85 : vector<8x1xf32> to vector<8x128xf32>
      %87 = arith.mulf %86, %arg20 : vector<8x128xf32>
      %88 = arith.addf %83, %87 : vector<8x128xf32>
      %89 = vector.broadcast %74 : vector<8x1xf32> to vector<8x128xf32>
      %90 = arith.mulf %89, %70 : vector<8x128xf32>
      %91 = arith.index_cast %arg18 : i32 to index
      %c0_50 = arith.constant 0 : index
      %c0_51 = arith.constant 0 : index
      %92 = vector.load %arg14[%91, %c0_50, %c0_51] : memref<8x8x128xf32, #tpu.memory_space<vmem>>, vector<1x8x128xf32>
      %93 = vector.shape_cast %92 : vector<1x8x128xf32> to vector<8x128xf32>
      %94 = vector.shape_cast %90 : vector<8x128xf32> to vector<1x8x128xf32>
      tpu.vector_store %arg14[%91, %c0_50, %c0_51], %94 {strides = array<i32>} : memref<8x8x128xf32, #tpu.memory_space<vmem>>, vector<1x8x128xf32>,
      scf.yield %81, %88 : vector<8x128xf32>, vector<8x128xf32>
    }
    %c0_28 = arith.constant 0 : index
    %c0_29 = arith.constant 0 : index
    %c0_30 = arith.constant 0 : index
    %30 = vector.load %arg14[%c0_28, %c0_29, %c0_30] : memref<8x8x128xf32, #tpu.memory_space<vmem>>, vector<8x8x128xf32>
    %31 = vector.shape_cast %30 : vector<8x8x128xf32> to vector<64x128xf32>
    %32 = arith.truncf %31 : vector<64x128xf32> to vector<64x128xbf16>
    %c0_31 = arith.constant 0 : index
    %c0_32 = arith.constant 0 : index
    %33 = vector.load %arg11[%c0_31, %c0_32] : memref<128x128xbf16, #tpu.memory_space<vmem>>, vector<128x128xbf16>
    %cst_33 = arith.constant dense<0.000000e+00> : vector<64x128xf32>
    %34 = tpu.matmul %32, %33, %cst_33 {dimension_numbers = #tpu.dot_dimension_numbers<[1], [0], [0], [1], [0, 0, 1, 1], [], []>} : vector<64x128xbf16>, vector<128x128xbf16>, vector<64x128xf32> -> vector<64x128xf32>
    %35 = vector.shape_cast %34 : vector<64x128xf32> to vector<8x8x128xf32>
    %c0_34 = arith.constant 0 : index
    %c0_35 = arith.constant 0 : index
    %c0_36 = arith.constant 0 : index
    %36 = vector.load %arg15[%c0_34, %c0_35, %c0_36] : memref<8x8x128xf32, #tpu.memory_space<vmem>>, vector<8x8x128xf32>
    tpu.vector_store %arg15[%c0_34, %c0_35, %c0_36], %35 {strides = array<i32>} : memref<8x8x128xf32, #tpu.memory_space<vmem>>, vector<8x8x128xf32>,
    %c0_i32_37 = arith.constant 0 : i32
    %c6_i32 = arith.constant 6 : i32
    %37 = arith.addi %c0_i32_37, %c6_i32 : i32
    %c1_i32_38 = arith.constant 1 : i32
    %38:2 = scf.for %arg18 = %c0_i32_37 to %37 step %c1_i32_38 iter_args(%arg19 = %29#0, %arg20 = %29#1) -> (vector<8x128xf32>, vector<8x128xf32>)  : i32 {
      %39 = arith.index_cast %arg18 : i32 to index
      %c0_40 = arith.constant 0 : index
      %c0_41 = arith.constant 0 : index
      %40 = vector.load %arg17[%39, %c0_40, %c0_41] : memref<6x8x512xf32, #tpu.memory_space<vmem>>, vector<1x8x512xf32>
      %41 = vector.shape_cast %40 : vector<1x8x512xf32> to vector<8x512xf32>
      %42 = arith.truncf %arg19 : vector<8x128xf32> to vector<8x128xbf16>
      %c0_42 = arith.constant 0 : index
      %c0_43 = arith.constant 0 : index
      %43 = vector.load %arg9[%c0_42, %c0_43] : memref<128x512xbf16, #tpu.memory_space<vmem>>, vector<128x512xbf16>
      %cst_44 = arith.constant dense<0.000000e+00> : vector<8x512xf32>
      %44 = tpu.matmul %42, %43, %cst_44 {dimension_numbers = #tpu.dot_dimension_numbers<[1], [0], [0], [1], [0, 0, 1, 1], [], []>} : vector<8x128xbf16>, vector<128x512xbf16>, vector<8x512xf32> -> vector<8x512xf32>
      %45 = arith.addf %41, %44 : vector<8x512xf32>
      %46 = vector.extract_strided_slice %45 {offsets = [0, 0], sizes = [8, 128], strides = [1, 1]} : vector<8x512xf32> to vector<8x128xf32>
      %47 = arith.negf %46 : vector<8x128xf32>
      %48 = math.exp %47 : vector<8x128xf32>
      %cst_45 = arith.constant 1.000000e+00 : f32
      %49 = vector.broadcast %cst_45 : f32 to vector<8x128xf32>
      %50 = arith.addf %49, %48 : vector<8x128xf32>
      %51 = arith.divf %49, %50 : vector<8x128xf32>
      %52 = vector.extract_strided_slice %45 {offsets = [0, 128], sizes = [8, 128], strides = [1, 1]} : vector<8x512xf32> to vector<8x128xf32>
      %53 = arith.negf %52 : vector<8x128xf32>
      %54 = math.exp %53 : vector<8x128xf32>
      %cst_46 = arith.constant 1.000000e+00 : f32
      %55 = vector.broadcast %cst_46 : f32 to vector<8x128xf32>
      %56 = arith.addf %55, %54 : vector<8x128xf32>
      %57 = arith.divf %55, %56 : vector<8x128xf32>
      %58 = vector.extract_strided_slice %45 {offsets = [0, 256], sizes = [8, 128], strides = [1, 1]} : vector<8x512xf32> to vector<8x128xf32>
      %59 = math.tanh %58 : vector<8x128xf32>
      %60 = vector.extract_strided_slice %45 {offsets = [0, 384], sizes = [8, 128], strides = [1, 1]} : vector<8x512xf32> to vector<8x128xf32>
      %61 = arith.negf %60 : vector<8x128xf32>
      %62 = math.exp %61 : vector<8x128xf32>
      %cst_47 = arith.constant 1.000000e+00 : f32
      %63 = vector.broadcast %cst_47 : f32 to vector<8x128xf32>
      %64 = arith.addf %63, %62 : vector<8x128xf32>
      %65 = arith.divf %63, %64 : vector<8x128xf32>
      %66 = arith.mulf %57, %arg20 : vector<8x128xf32>
      %67 = arith.mulf %51, %59 : vector<8x128xf32>
      %68 = arith.addf %66, %67 : vector<8x128xf32>
      %69 = math.tanh %68 : vector<8x128xf32>
      %70 = arith.mulf %65, %69 : vector<8x128xf32>
      %c0_48 = arith.constant 0 : index
      %c0_49 = arith.constant 0 : index
      %c0_50 = arith.constant 0 : index
      %71 = vector.load %arg15[%c0_48, %c0_49, %c0_50] : memref<8x8x128xf32, #tpu.memory_space<vmem>>, vector<8x8x128xf32>
      %72 = vector.shape_cast %70 : vector<8x128xf32> to vector<1x8x128xf32>
      %73 = vector.broadcast %72 : vector<1x8x128xf32> to vector<8x8x128xf32>
      %74 = arith.mulf %71, %73 : vector<8x8x128xf32>
      %cst_51 = arith.constant dense<0.000000e+00> : vector<8x8xf32>
      %75 = vector.multi_reduction <add>, %74, %cst_51 [2] : vector<8x8x128xf32> to vector<8x8xf32>
      %76 = tpu.iota {dimensions = array<i32: 1>} : vector<8x8xi32>
      %77 = vector.broadcast %22 : vector<8x1xi32> to vector<8x8xi32>
      %78 = arith.cmpi slt, %76, %77 : vector<8x8xi32>
      %cst_52 = arith.constant 0.000000e+00 : f32
      %cst_53 = arith.constant -1.000000e+30 : f32
      %79 = vector.broadcast %cst_52 : f32 to vector<8x8xf32>
      %80 = vector.broadcast %cst_53 : f32 to vector<8x8xf32>
      %81 = arith.select %78, %79, %80 : vector<8x8xi1>, vector<8x8xf32>
      %82 = tpu.transpose %75, [1, 0] : vector<8x8xf32> -> vector<8x8xf32>
      %83 = arith.addf %82, %81 : vector<8x8xf32>
      %cst_54 = arith.constant dense<0xFF800000> : vector<8xf32>
      %84 = vector.multi_reduction <maximumf>, %83, %cst_54 [1] : vector<8x8xf32> to vector<8xf32>
      %85 = vector.shape_cast %84 : vector<8xf32> to vector<8x1xf32>
      %86 = vector.broadcast %85 : vector<8x1xf32> to vector<8x8xf32>
      %87 = arith.subf %83, %86 : vector<8x8xf32>
      %88 = math.exp %87 : vector<8x8xf32>
      %cst_55 = arith.constant dense<0.000000e+00> : vector<8xf32>
      %89 = vector.multi_reduction <add>, %88, %cst_55 [1] : vector<8x8xf32> to vector<8xf32>
      %90 = vector.shape_cast %89 : vector<8xf32> to vector<8x1xf32>
      %91 = tpu.reciprocal %90 {approx = true} : vector<8x1xf32> -> vector<8x1xf32>
      %92 = vector.broadcast %91 : vector<8x1xf32> to vector<8x8xf32>
      %93 = arith.mulf %88, %92 : vector<8x8xf32>
      %c0_56 = arith.constant 0 : index
      %c0_57 = arith.constant 0 : index
      %c0_58 = arith.constant 0 : index
      %94 = vector.load %arg14[%c0_56, %c0_57, %c0_58] : memref<8x8x128xf32, #tpu.memory_space<vmem>>, vector<8x8x128xf32>
      %95 = tpu.transpose %93, [1, 0] : vector<8x8xf32> -> vector<8x8xf32>
      %96 = vector.shape_cast %95 : vector<8x8xf32> to vector<8x8x1xf32>
      %97 = vector.broadcast %96 : vector<8x8x1xf32> to vector<8x8x128xf32>
      %98 = arith.mulf %94, %97 : vector<8x8x128xf32>
      %cst_59 = arith.constant dense<0.000000e+00> : vector<8x128xf32>
      %99 = vector.multi_reduction <add>, %98, %cst_59 [0] : vector<8x8x128xf32> to vector<8x128xf32>
      %100 = tpu.concatenate %99, %70 in 1 : vector<8x128xf32>, vector<8x128xf32> -> vector<8x256xf32>
      %101 = arith.truncf %100 : vector<8x256xf32> to vector<8x256xbf16>
      %c0_60 = arith.constant 0 : index
      %c0_61 = arith.constant 0 : index
      %102 = vector.load %arg12[%c0_60, %c0_61] : memref<256x128xbf16, #tpu.memory_space<vmem>>, vector<256x128xbf16>
      %cst_62 = arith.constant dense<0.000000e+00> : vector<8x128xf32>
      %103 = tpu.matmul %101, %102, %cst_62 {dimension_numbers = #tpu.dot_dimension_numbers<[1], [0], [0], [1], [0, 0, 1, 1], [], []>} : vector<8x256xbf16>, vector<256x128xbf16>, vector<8x128xf32> -> vector<8x128xf32>
      %104 = math.tanh %103 : vector<8x128xf32>
      %105 = arith.index_cast %arg18 : i32 to index
      %c0_63 = arith.constant 0 : index
      %c0_64 = arith.constant 0 : index
      %106 = vector.load %arg13[%105, %c0_63, %c0_64] : memref<6x8x128xf32, #tpu.memory_space<vmem>>, vector<1x8x128xf32>
      %107 = vector.shape_cast %106 : vector<1x8x128xf32> to vector<8x128xf32>
      %108 = vector.shape_cast %104 : vector<8x128xf32> to vector<1x8x128xf32>
      tpu.vector_store %arg13[%105, %c0_63, %c0_64], %108 {strides = array<i32>} : memref<6x8x128xf32, #tpu.memory_space<vmem>>, vector<1x8x128xf32>,
      scf.yield %70, %68 : vector<8x128xf32>, vector<8x128xf32>
    }
    %c6_i32_39 = arith.constant 6 : i32
    return
  }
  func.func @transform_0(%arg0: i32, %arg1: memref<1xi32, #tpu.memory_space<smem>>) -> (i32, i32, i32) {
    %c0_i32 = arith.constant 0 : i32
    %c0_i32_0 = arith.constant 0 : i32
    %c0_i32_1 = arith.constant 0 : i32
    return %c0_i32, %arg0, %c0_i32_0 : i32, i32, i32
  }
  func.func @transform_1(%arg0: i32, %arg1: memref<1xi32, #tpu.memory_space<smem>>) -> (i32, i32, i32) {
    %c0_i32 = arith.constant 0 : i32
    %c0_i32_0 = arith.constant 0 : i32
    %c0_i32_1 = arith.constant 0 : i32
    return %c0_i32, %arg0, %c0_i32_0 : i32, i32, i32
  }
  func.func @transform_2(%arg0: i32, %arg1: memref<1xi32, #tpu.memory_space<smem>>) -> (i32, i32) {
    %c0_i32 = arith.constant 0 : i32
    %c0_i32_0 = arith.constant 0 : i32
    return %arg0, %c0_i32 : i32, i32
  }
  func.func @transform_3(%arg0: i32, %arg1: memref<1xi32, #tpu.memory_space<smem>>) -> (i32, i32) {
    %c0_i32 = arith.constant 0 : i32
    %c0_i32_0 = arith.constant 0 : i32
    %c0_i32_1 = arith.constant 0 : i32
    return %c0_i32, %c0_i32_0 : i32, i32
  }
  func.func @transform_4(%arg0: i32, %arg1: memref<1xi32, #tpu.memory_space<smem>>) -> (i32, i32) {
    %c0_i32 = arith.constant 0 : i32
    %c0_i32_0 = arith.constant 0 : i32
    %c0_i32_1 = arith.constant 0 : i32
    return %c0_i32, %c0_i32_0 : i32, i32
  }
  func.func @transform_5(%arg0: i32, %arg1: memref<1xi32, #tpu.memory_space<smem>>) -> (i32, i32) {
    %c0_i32 = arith.constant 0 : i32
    %c0_i32_0 = arith.constant 0 : i32
    %c0_i32_1 = arith.constant 0 : i32
    return %c0_i32, %c0_i32_0 : i32, i32
  }
  func.func @transform_6(%arg0: i32, %arg1: memref<1xi32, #tpu.memory_space<smem>>) -> (i32, i32) {
    %c0_i32 = arith.constant 0 : i32
    %c0_i32_0 = arith.constant 0 : i32
    %c0_i32_1 = arith.constant 0 : i32
    return %c0_i32, %c0_i32_0 : i32, i32
  }
  func.func @transform_7(%arg0: i32, %arg1: memref<1xi32, #tpu.memory_space<smem>>) -> (i32, i32) {
    %c0_i32 = arith.constant 0 : i32
    %c0_i32_0 = arith.constant 0 : i32
    %c0_i32_1 = arith.constant 0 : i32
    return %c0_i32, %c0_i32_0 : i32, i32
  }
  func.func @transform_8(%arg0: i32, %arg1: memref<1xi32, #tpu.memory_space<smem>>) -> (i32, i32) {
    %c0_i32 = arith.constant 0 : i32
    %c0_i32_0 = arith.constant 0 : i32
    %c0_i32_1 = arith.constant 0 : i32
    return %c0_i32, %c0_i32_0 : i32, i32
  }
  func.func @transform_9(%arg0: i32, %arg1: memref<1xi32, #tpu.memory_space<smem>>) -> (i32, i32) {
    %c0_i32 = arith.constant 0 : i32
    %c0_i32_0 = arith.constant 0 : i32
    %c0_i32_1 = arith.constant 0 : i32
    return %c0_i32, %c0_i32_0 : i32, i32
  }
  func.func @transform_10(%arg0: i32, %arg1: memref<1xi32, #tpu.memory_space<smem>>) -> (i32, i32) {
    %c0_i32 = arith.constant 0 : i32
    %c0_i32_0 = arith.constant 0 : i32
    %c0_i32_1 = arith.constant 0 : i32
    return %c0_i32, %c0_i32_0 : i32, i32
  }
  func.func @transform_11(%arg0: i32, %arg1: memref<1xi32, #tpu.memory_space<smem>>) -> (i32, i32, i32) {
    %c0_i32 = arith.constant 0 : i32
    %c0_i32_0 = arith.constant 0 : i32
    %c0_i32_1 = arith.constant 0 : i32
    return %c0_i32, %arg0, %c0_i32_0 : i32, i32, i32
  }
}

</mosaic_0001>

<llo_original>
// kernel: seq2seq_forward.1
$region0: #{seq2seq_forward.1}
  #allocation0 [shape = 'u32[]', space=smem, size = 0x4, offset = 0x4, fixed_abs, tag = 'smem constant byte address 0x4 - core index']
  #allocation1 [shape = 'u32[144,128]{1,0:T(1,128)}', space=vmem, size = 0x12000, scoped, tag = 'internal scratch']
  #allocation2 [shape = 'f32[8,8,128]{2,1,0:T(8,128)}', space=vmem, size = 0x8000, scoped, tag = 'scratch operand']
  #allocation3 [shape = 'f32[8,8,128]{2,1,0:T(8,128)}', space=vmem, size = 0x8000, scoped, tag = 'scratch operand']
  #allocation4 [shape = 'f32[8,8,512]{2,1,0:T(8,128)}', space=vmem, size = 0x20000, scoped, tag = 'scratch operand']
  #allocation5 [shape = 'f32[6,8,512]{2,1,0:T(8,128)}', space=vmem, size = 0x18000, scoped, tag = 'scratch operand']
  #allocation6 [shape = 's32[1]{0}', space=sflag, size = 0x4, scoped, tag = 'scoped memory for seq2seq_forward.1']
  #allocation7 [shape = 's32[1]{0:T(128)S(6)}', space=smem, size = 0x200, scoped, tag = 'prefetched SMEM operand 0']
  %s0 = inlined_call_operand.<no memory space> [shape: s32[1], index: 0, kind: input, shape index: {}]
  %s1 = inlined_call_operand.vmem [shape: f32[8,8,128], index: 1, kind: input, shape index: {}]
  %s2 = inlined_call_operand.vmem [shape: f32[6,8,128], index: 2, kind: input, shape index: {}]
  %s3 = inlined_call_operand.vmem [shape: s32[8,1], index: 3, kind: input, shape index: {}]
  %s4 = inlined_call_operand.vmem [shape: bf16[128,512], index: 4, kind: input, shape index: {}]
  %s5 = inlined_call_operand.vmem [shape: bf16[128,512], index: 5, kind: input, shape index: {}]
  %s6 = inlined_call_operand.vmem [shape: f32[1,512], index: 6, kind: input, shape index: {}]
  %s7 = inlined_call_operand.vmem [shape: bf16[128,512], index: 7, kind: input, shape index: {}]
  %s8 = inlined_call_operand.vmem [shape: bf16[128,512], index: 8, kind: input, shape index: {}]
  %s9 = inlined_call_operand.vmem [shape: f32[1,512], index: 9, kind: input, shape index: {}]
  %s10 = inlined_call_operand.vmem [shape: bf16[128,128], index: 10, kind: input, shape index: {}]
  %s11 = inlined_call_operand.vmem [shape: bf16[256,128], index: 11, kind: input, shape index: {}]
  %s12 = inlined_call_operand.vmem [shape: f32[6,8,128], index: 12, kind: output, shape index: {}]
  %s13 = sld [smem:[#allocation0]]
  $region68: #{seq2seq_forward.1} parent=0
    _
  %s15 = ssub.s32 1, %s13
  %s16 = scalar_select 0, %s15, %s13
  %17 = sst [smem:[#allocation7]] %s0
  // Predicated region
  $region2: #{seq2seq_forward.1} parent=0 // pred_check
    _
  $region3: #{seq2seq_forward.1} parent=0 // pred_check_branch
    %19 = sbr.rel (0) target = $region5
  $region4: #{seq2seq_forward.1} parent=0 // pred_region
    _
  $region5: #{seq2seq_forward.1} parent=0 // pred_fallthru
    _
  // Predicated region
  $region6: #{seq2seq_forward.1} parent=0 // pred_check
    _
  $region7: #{seq2seq_forward.1} parent=0 // pred_check_branch
    %21 = sbr.rel (0) target = $region9
  $region8: #{seq2seq_forward.1} parent=0 // pred_region
    _
  $region9: #{seq2seq_forward.1} parent=0 // pred_fallthru
    _
  // Predicated region
  $region10: #{seq2seq_forward.1} parent=0 // pred_check
    _
  $region11: #{seq2seq_forward.1} parent=0 // pred_check_branch
    %23 = sbr.rel (0) target = $region13
  $region12: #{seq2seq_forward.1} parent=0 // pred_region
    _
  $region13: #{seq2seq_forward.1} parent=0 // pred_fallthru
    _
  // Predicated region
  $region14: #{seq2seq_forward.1} parent=0 // pred_check
    _
  $region15: #{seq2seq_forward.1} parent=0 // pred_check_branch
    %25 = sbr.rel (0) target = $region17
  $region16: #{seq2seq_forward.1} parent=0 // pred_region
    _
  $region17: #{seq2seq_forward.1} parent=0 // pred_fallthru
    _
  // Predicated region
  $region18: #{seq2seq_forward.1} parent=0 // pred_check
    _
  $region19: #{seq2seq_forward.1} parent=0 // pred_check_branch
    %27 = sbr.rel (0) target = $region21
  $region20: #{seq2seq_forward.1} parent=0 // pred_region
    _
  $region21: #{seq2seq_forward.1} parent=0 // pred_fallthru
    _
  // Predicated region
  $region22: #{seq2seq_forward.1} parent=0 // pred_check
    _
  $region23: #{seq2seq_forward.1} parent=0 // pred_check_branch
    %29 = sbr.rel (0) target = $region25
  $region24: #{seq2seq_forward.1} parent=0 // pred_region
    _
  $region25: #{seq2seq_forward.1} parent=0 // pred_fallthru
    _
  // Predicated region
  $region26: #{seq2seq_forward.1} parent=0 // pred_check
    _
  $region27: #{seq2seq_forward.1} parent=0 // pred_check_branch
    %31 = sbr.rel (0) target = $region29
  $region28: #{seq2seq_forward.1} parent=0 // pred_region
    _
  $region29: #{seq2seq_forward.1} parent=0 // pred_fallthru
    _
  // Predicated region
  $region30: #{seq2seq_forward.1} parent=0 // pred_check
    _
  $region31: #{seq2seq_forward.1} parent=0 // pred_check_branch
    %33 = sbr.rel (0) target = $region33
  $region32: #{seq2seq_forward.1} parent=0 // pred_region
    _
  $region33: #{seq2seq_forward.1} parent=0 // pred_fallthru
    _
  // Predicated region
  $region34: #{seq2seq_forward.1} parent=0 // pred_check
    _
  $region35: #{seq2seq_forward.1} parent=0 // pred_check_branch
    %35 = sbr.rel (0) target = $region37
  $region36: #{seq2seq_forward.1} parent=0 // pred_region
    _
  $region37: #{seq2seq_forward.1} parent=0 // pred_fallthru
    _
  // Predicated region
  $region38: #{seq2seq_forward.1} parent=0 // pred_check
    _
  $region39: #{seq2seq_forward.1} parent=0 // pred_check_branch
    %37 = sbr.rel (0) target = $region41
  $region40: #{seq2seq_forward.1} parent=0 // pred_region
    _
  $region41: #{seq2seq_forward.1} parent=0 // pred_fallthru
    _
  // Predicated region
  $region42: #{seq2seq_forward.1} parent=0 // pred_check
    _
  $region43: #{seq2seq_forward.1} parent=0 // pred_check_branch
    %39 = sbr.rel (0) target = $region45
  $region44: #{seq2seq_forward.1} parent=0 // pred_region
    _
  $region45: #{seq2seq_forward.1} parent=0 // pred_fallthru
    _
  %v41 = vld [vmem:[%s1] sm:$0xff]
  %v42 = vld [vmem:[%s1 + $0x8] sm:$0xff]
  %v43 = vld [vmem:[%s1 + $0x10] sm:$0xff]
  %v44 = vld [vmem:[%s1 + $0x18] sm:$0xff]
  %v45 = vld [vmem:[%s1 + $0x20] sm:$0xff]
  %v46 = vld [vmem:[%s1 + $0x28] sm:$0xff]
  %v47 = vld [vmem:[%s1 + $0x30] sm:$0xff]
  %v48 = vld [vmem:[%s1 + $0x38] sm:$0xff]
  %v49 = vpack.c.bf16 %v42, %v41
  %v50 = vpack.c.bf16 %v44, %v43
  %v51 = vpack.c.bf16 %v46, %v45
  %v52 = vpack.c.bf16 %v48, %v47
  %v53 = vld [vmem:[%s4] sm:$0xff]
  %v54 = vld [vmem:[%s4 + $0x8] sm:$0xff]
  %v55 = vld [vmem:[%s4 + $0x10] sm:$0xff]
  %v56 = vld [vmem:[%s4 + $0x18] sm:$0xff]
  %v57 = vld [vmem:[%s4 + $0x20] sm:$0xff]
  %v58 = vld [vmem:[%s4 + $0x28] sm:$0xff]
  %v59 = vld [vmem:[%s4 + $0x30] sm:$0xff]
  %v60 = vld [vmem:[%s4 + $0x38] sm:$0xff]
  %v61 = vld [vmem:[%s4 + $0x40] sm:$0xff]
  %v62 = vld [vmem:[%s4 + $0x48] sm:$0xff]
  %v63 = vld [vmem:[%s4 + $0x50] sm:$0xff]
  %v64 = vld [vmem:[%s4 + $0x58] sm:$0xff]
  %v65 = vld [vmem:[%s4 + $0x60] sm:$0xff]
  %v66 = vld [vmem:[%s4 + $0x68] sm:$0xff]
  %v67 = vld [vmem:[%s4 + $0x70] sm:$0xff]
  %v68 = vld [vmem:[%s4 + $0x78] sm:$0xff]
  %v69 = vld [vmem:[%s4 + $0x80] sm:$0xff]
  %v70 = vld [vmem:[%s4 + $0x88] sm:$0xff]
  %v71 = vld [vmem:[%s4 + $0x90] sm:$0xff]
  %v72 = vld [vmem:[%s4 + $0x98] sm:$0xff]
  %v73 = vld [vmem:[%s4 + $0xa0] sm:$0xff]
  %v74 = vld [vmem:[%s4 + $0xa8] sm:$0xff]
  %v75 = vld [vmem:[%s4 + $0xb0] sm:$0xff]
  %v76 = vld [vmem:[%s4 + $0xb8] sm:$0xff]
  %v77 = vld [vmem:[%s4 + $0xc0] sm:$0xff]
  %v78 = vld [vmem:[%s4 + $0xc8] sm:$0xff]
  %v79 = vld [vmem:[%s4 + $0xd0] sm:$0xff]
  %v80 = vld [vmem:[%s4 + $0xd8] sm:$0xff]
  %v81 = vld [vmem:[%s4 + $0xe0] sm:$0xff]
  %v82 = vld [vmem:[%s4 + $0xe8] sm:$0xff]
  %v83 = vld [vmem:[%s4 + $0xf0] sm:$0xff]
  %v84 = vld [vmem:[%s4 + $0xf8] sm:$0xff]
  %v85 = vld [vmem:[%s6] sm:$0xf]
  %v87 = vlaneseq
  %v88 = vshrl.u32 %v87, 7
  %v89 = vsub.s32 0, %v88
  %v90 = vrot.slane %v85, %v89
  %v91 = vlaneseq
  %v92 = vshrl.u32 %v91, 7
  %v93 = vsub.s32 1, %v92
  %v94 = vrot.slane %v85, %v93
  %v95 = vlaneseq
  %v96 = vshrl.u32 %v95, 7
  %v97 = vsub.s32 2, %v96
  %v98 = vrot.slane %v85, %v97
  %v99 = vlaneseq
  %v100 = vshrl.u32 %v99, 7
  %v101 = vsub.s32 3, %v100
  %v102 = vrot.slane %v85, %v101
  %v139 = vunpack.c.l.b16 %v53
  %v140 = vunpack.c.h.b16 %v53
  %v141 = vunpack.c.l.b16 %v54
  %v142 = vunpack.c.h.b16 %v54
  %v143 = vunpack.c.l.b16 %v55
  %v144 = vunpack.c.h.b16 %v55
  %v145 = vunpack.c.l.b16 %v56
  %v146 = vunpack.c.h.b16 %v56
  %v147 = vunpack.c.l.b16 %v57
  %v148 = vunpack.c.h.b16 %v57
  %v149 = vunpack.c.l.b16 %v58
  %v150 = vunpack.c.h.b16 %v58
  %v151 = vunpack.c.l.b16 %v59
  %v152 = vunpack.c.h.b16 %v59
  %v153 = vunpack.c.l.b16 %v60
  %v154 = vunpack.c.h.b16 %v60
  %v155 = vunpack.c.l.b16 %v61
  %v156 = vunpack.c.h.b16 %v61
  %v157 = vunpack.c.l.b16 %v62
  %v158 = vunpack.c.h.b16 %v62
  %v159 = vunpack.c.l.b16 %v63
  %v160 = vunpack.c.h.b16 %v63
  %v161 = vunpack.c.l.b16 %v64
  %v162 = vunpack.c.h.b16 %v64
  %v163 = vunpack.c.l.b16 %v65
  %v164 = vunpack.c.h.b16 %v65
  %v165 = vunpack.c.l.b16 %v66
  %v166 = vunpack.c.h.b16 %v66
  %v167 = vunpack.c.l.b16 %v67
  %v168 = vunpack.c.h.b16 %v67
  %v169 = vunpack.c.l.b16 %v68
  %v170 = vunpack.c.h.b16 %v68
  %v171 = vunpack.c.l.b16 %v69
  %v172 = vunpack.c.h.b16 %v69
  %v173 = vunpack.c.l.b16 %v70
  %v174 = vunpack.c.h.b16 %v70
  %v175 = vunpack.c.l.b16 %v71
  %v176 = vunpack.c.h.b16 %v71
  %v177 = vunpack.c.l.b16 %v72
  %v178 = vunpack.c.h.b16 %v72
  %v179 = vunpack.c.l.b16 %v73
  %v180 = vunpack.c.h.b16 %v73
  %v181 = vunpack.c.l.b16 %v74
  %v182 = vunpack.c.h.b16 %v74
  %v183 = vunpack.c.l.b16 %v75
  %v184 = vunpack.c.h.b16 %v75
  %v185 = vunpack.c.l.b16 %v76
  %v186 = vunpack.c.h.b16 %v76
  %v187 = vunpack.c.l.b16 %v77
  %v188 = vunpack.c.h.b16 %v77
  %v189 = vunpack.c.l.b16 %v78
  %v190 = vunpack.c.h.b16 %v78
  %v191 = vunpack.c.l.b16 %v79
  %v192 = vunpack.c.h.b16 %v79
  %v193 = vunpack.c.l.b16 %v80
  %v194 = vunpack.c.h.b16 %v80
  %v195 = vunpack.c.l.b16 %v81
  %v196 = vunpack.c.h.b16 %v81
  %v197 = vunpack.c.l.b16 %v82
  %v198 = vunpack.c.h.b16 %v82
  %v199 = vunpack.c.l.b16 %v83
  %v200 = vunpack.c.h.b16 %v83
  %v201 = vunpack.c.l.b16 %v84
  %v202 = vunpack.c.h.b16 %v84
  %v203 = vpack.c.b16 %v143, %v139
  %v204 = vpack.c.b16 %v144, %v140
  %v205 = vpack.c.b16 %v145, %v141
  %v206 = vpack.c.b16 %v146, %v142
  %v207 = vpack.c.b16 %v151, %v147
  %v208 = vpack.c.b16 %v152, %v148
  %v209 = vpack.c.b16 %v153, %v149
  %v210 = vpack.c.b16 %v154, %v150
  %v211 = vpack.c.b16 %v159, %v155
  %v212 = vpack.c.b16 %v160, %v156
  %v213 = vpack.c.b16 %v161, %v157
  %v214 = vpack.c.b16 %v162, %v158
  %v215 = vpack.c.b16 %v167, %v163
  %v216 = vpack.c.b16 %v168, %v164
  %v217 = vpack.c.b16 %v169, %v165
  %v218 = vpack.c.b16 %v170, %v166
  %v219 = vpack.c.b16 %v175, %v171
  %v220 = vpack.c.b16 %v176, %v172
  %v221 = vpack.c.b16 %v177, %v173
  %v222 = vpack.c.b16 %v178, %v174
  %v223 = vpack.c.b16 %v183, %v179
  %v224 = vpack.c.b16 %v184, %v180
  %v225 = vpack.c.b16 %v185, %v181
  %v226 = vpack.c.b16 %v186, %v182
  %v227 = vpack.c.b16 %v191, %v187
  %v228 = vpack.c.b16 %v192, %v188
  %v229 = vpack.c.b16 %v193, %v189
  %v230 = vpack.c.b16 %v194, %v190
  %v231 = vpack.c.b16 %v199, %v195
  %v232 = vpack.c.b16 %v200, %v196
  %v233 = vpack.c.b16 %v201, %v197
  %v234 = vpack.c.b16 %v202, %v198
  %267 = vmatprep.subr.bf16.mxu0 %v204
  %268 = vmatpush1.bf16.msra.mxu0 %v203
  %269 = vmatprep.subr.bf16.mxu0 %v208
  %270 = vmatpush1.bf16.msra.mxu0 %v207
  %271 = vmatprep.subr.bf16.mxu0 %v212
  %272 = vmatpush1.bf16.msra.mxu0 %v211
  %273 = vmatprep.subr.bf16.mxu0 %v216
  %274 = vmatpush1.bf16.msra.mxu0 %v215
  %275 = vmatprep.subr.bf16.mxu0 %v220
  %276 = vmatpush1.bf16.msra.mxu0 %v219
  %277 = vmatprep.subr.bf16.mxu0 %v224
  %278 = vmatpush1.bf16.msra.mxu0 %v223
  %279 = vmatprep.subr.bf16.mxu0 %v228
  %280 = vmatpush1.bf16.msra.mxu0 %v227
  %281 = vmatprep.subr.bf16.mxu0 %v232
  %282 = vmatpush1.bf16.msra.mxu0 %v231
  %283 = vmatprep.subr.bf16.mxu0 0
  %284 = vmatpush1.bf16.msra.mxu0 0
  %285 = vmatprep.subr.bf16.mxu0 0
  %286 = vmatpush1.bf16.msra.mxu0 0
  %287 = vmatprep.subr.bf16.mxu0 0
  %288 = vmatpush1.bf16.msra.mxu0 0
  %289 = vmatprep.subr.bf16.mxu0 0
  %290 = vmatpush1.bf16.msra.mxu0 0
  %291 = vmatprep.subr.bf16.mxu0 0
  %292 = vmatpush1.bf16.msra.mxu0 0
  %293 = vmatprep.subr.bf16.mxu0 0
  %294 = vmatpush1.bf16.msra.mxu0 0
  %295 = vmatprep.subr.bf16.mxu0 0
  %296 = vmatpush1.bf16.msra.mxu0 0
  %297 = vmatprep.subr.bf16.mxu0 0
  %298 = vmatpush1.bf16.msra.mxu0 0
  %299 = vmatprep.mubr.bf16.mxu0 0
  %300 = vmatmul.mubr.bf16.gmra.mrb[0].mxu0 %v49
  %v301 = vpop.f32.mrb[0].mxu0
  %v302 = vadd.f32 %v90, %v301
  %v303 = vpop.f32.mrb[0].mxu0
  %v304 = vadd.f32 %v94, %v303
  %v305 = vpop.f32.mrb[0].mxu0
  %v306 = vadd.f32 %v90, %v305
  %v307 = vpop.f32.mrb[0].mxu0
  %v308 = vadd.f32 %v94, %v307
  %309 = vmatprep.mubr.bf16.mxu0 0
  %310 = vmatmul.mubr.bf16.gmra.mrb[0].mxu0 %v50
  %v311 = vpop.f32.mrb[0].mxu0
  %v312 = vadd.f32 %v90, %v311
  %v313 = vpop.f32.mrb[0].mxu0
  %v314 = vadd.f32 %v94, %v313
  %v315 = vpop.f32.mrb[0].mxu0
  %v316 = vadd.f32 %v90, %v315
  %v317 = vpop.f32.mrb[0].mxu0
  %v318 = vadd.f32 %v94, %v317
  %319 = vmatprep.mubr.bf16.mxu0 0
  %320 = vmatmul.mubr.bf16.gmra.mrb[0].mxu0 %v51
  %v321 = vpop.f32.mrb[0].mxu0
  %v322 = vadd.f32 %v90, %v321
  %v323 = vpop.f32.mrb[0].mxu0
  %v324 = vadd.f32 %v94, %v323
  %v325 = vpop.f32.mrb[0].mxu0
  %v326 = vadd.f32 %v90, %v325
  %v327 = vpop.f32.mrb[0].mxu0
  %v328 = vadd.f32 %v94, %v327
  %329 = vmatprep.mubr.bf16.mxu0 0
  %330 = vmatmul.mubr.bf16.gmra.mrb[0].mxu0 %v52
  %v331 = vpop.f32.mrb[0].mxu0
  %v332 = vadd.f32 %v90, %v331
  %v333 = vpop.f32.mrb[0].mxu0
  %v334 = vadd.f32 %v94, %v333
  %v335 = vpop.f32.mrb[0].mxu0
  %v336 = vadd.f32 %v90, %v335
  %v337 = vpop.f32.mrb[0].mxu0
  %v338 = vadd.f32 %v94, %v337
  %339 = vdwg.mxu0
  %340 = vmatprep.subr.bf16.mxu0 %v206
  %341 = vmatpush1.bf16.msra.mxu0 %v205
  %342 = vmatprep.subr.bf16.mxu0 %v210
  %343 = vmatpush1.bf16.msra.mxu0 %v209
  %344 = vmatprep.subr.bf16.mxu0 %v214
  %345 = vmatpush1.bf16.msra.mxu0 %v213
  %346 = vmatprep.subr.bf16.mxu0 %v218
  %347 = vmatpush1.bf16.msra.mxu0 %v217
  %348 = vmatprep.subr.bf16.mxu0 %v222
  %349 = vmatpush1.bf16.msra.mxu0 %v221
  %350 = vmatprep.subr.bf16.mxu0 %v226
  %351 = vmatpush1.bf16.msra.mxu0 %v225
  %352 = vmatprep.subr.bf16.mxu0 %v230
  %353 = vmatpush1.bf16.msra.mxu0 %v229
  %354 = vmatprep.subr.bf16.mxu0 %v234
  %355 = vmatpush1.bf16.msra.mxu0 %v233
  %356 = vmatprep.subr.bf16.mxu0 0
  %357 = vmatpush1.bf16.msra.mxu0 0
  %358 = vmatprep.subr.bf16.mxu0 0
  %359 = vmatpush1.bf16.msra.mxu0 0
  %360 = vmatprep.subr.bf16.mxu0 0
  %361 = vmatpush1.bf16.msra.mxu0 0
  %362 = vmatprep.subr.bf16.mxu0 0
  %363 = vmatpush1.bf16.msra.mxu0 0
  %364 = vmatprep.subr.bf16.mxu0 0
  %365 = vmatpush1.bf16.msra.mxu0 0
  %366 = vmatprep.subr.bf16.mxu0 0
  %367 = vmatpush1.bf16.msra.mxu0 0
  %368 = vmatprep.subr.bf16.mxu0 0
  %369 = vmatpush1.bf16.msra.mxu0 0
  %370 = vmatprep.subr.bf16.mxu0 0
  %371 = vmatpush1.bf16.msra.mxu0 0
  %372 = vmatprep.mubr.bf16.mxu0 0
  %373 = vmatmul.mubr.bf16.gmra.mrb[0].mxu0 %v49
  %v374 = vpop.f32.mrb[0].mxu0
  %v375 = vadd.f32 %v98, %v374
  %v376 = vpop.f32.mrb[0].mxu0
  %v377 = vadd.f32 %v102, %v376
  %v378 = vpop.f32.mrb[0].mxu0
  %v379 = vadd.f32 %v98, %v378
  %v380 = vpop.f32.mrb[0].mxu0
  %v381 = vadd.f32 %v102, %v380
  %382 = vmatprep.mubr.bf16.mxu0 0
  %383 = vmatmul.mubr.bf16.gmra.mrb[0].mxu0 %v50
  %v384 = vpop.f32.mrb[0].mxu0
  %v385 = vadd.f32 %v98, %v384
  %v386 = vpop.f32.mrb[0].mxu0
  %v387 = vadd.f32 %v102, %v386
  %v388 = vpop.f32.mrb[0].mxu0
  %v389 = vadd.f32 %v98, %v388
  %v390 = vpop.f32.mrb[0].mxu0
  %v391 = vadd.f32 %v102, %v390
  %392 = vmatprep.mubr.bf16.mxu0 0
  %393 = vmatmul.mubr.bf16.gmra.mrb[0].mxu0 %v51
  %v394 = vpop.f32.mrb[0].mxu0
  %v395 = vadd.f32 %v98, %v394
  %v396 = vpop.f32.mrb[0].mxu0
  %v397 = vadd.f32 %v102, %v396
  %v398 = vpop.f32.mrb[0].mxu0
  %v399 = vadd.f32 %v98, %v398
  %v400 = vpop.f32.mrb[0].mxu0
  %v401 = vadd.f32 %v102, %v400
  %402 = vmatprep.mubr.bf16.mxu0 0
  %403 = vmatmul.mubr.bf16.gmra.mrb[0].mxu0 %v52
  %v404 = vpop.f32.mrb[0].mxu0
  %v405 = vadd.f32 %v98, %v404
  %v406 = vpop.f32.mrb[0].mxu0
  %v407 = vadd.f32 %v102, %v406
  %v408 = vpop.f32.mrb[0].mxu0
  %v409 = vadd.f32 %v98, %v408
  %v410 = vpop.f32.mrb[0].mxu0
  %v411 = vadd.f32 %v102, %v410
  %412 = vdwg.mxu0
  %413 = vst [vmem:[#allocation4] sm:$0xff] %v302
  %414 = vst [vmem:[#allocation4 + $0x8] sm:$0xff] %v304
  %415 = vst [vmem:[#allocation4 + $0x10] sm:$0xff] %v375
  %416 = vst [vmem:[#allocation4 + $0x18] sm:$0xff] %v377
  %417 = vst [vmem:[#allocation4 + $0x20] sm:$0xff] %v306
  %418 = vst [vmem:[#allocation4 + $0x28] sm:$0xff] %v308
  %419 = vst [vmem:[#allocation4 + $0x30] sm:$0xff] %v379
  %420 = vst [vmem:[#allocation4 + $0x38] sm:$0xff] %v381
  %421 = vst [vmem:[#allocation4 + $0x40] sm:$0xff] %v312
  %422 = vst [vmem:[#allocation4 + $0x48] sm:$0xff] %v314
  %423 = vst [vmem:[#allocation4 + $0x50] sm:$0xff] %v385
  %424 = vst [vmem:[#allocation4 + $0x58] sm:$0xff] %v387
  %425 = vst [vmem:[#allocation4 + $0x60] sm:$0xff] %v316
  %426 = vst [vmem:[#allocation4 + $0x68] sm:$0xff] %v318
  %427 = vst [vmem:[#allocation4 + $0x70] sm:$0xff] %v389
  %428 = vst [vmem:[#allocation4 + $0x78] sm:$0xff] %v391
  %429 = vst [vmem:[#allocation4 + $0x80] sm:$0xff] %v322
  %430 = vst [vmem:[#allocation4 + $0x88] sm:$0xff] %v324
  %431 = vst [vmem:[#allocation4 + $0x90] sm:$0xff] %v395
  %432 = vst [vmem:[#allocation4 + $0x98] sm:$0xff] %v397
  %433 = vst [vmem:[#allocation4 + $0xa0] sm:$0xff] %v326
  %434 = vst [vmem:[#allocation4 + $0xa8] sm:$0xff] %v328
  %435 = vst [vmem:[#allocation4 + $0xb0] sm:$0xff] %v399
  %436 = vst [vmem:[#allocation4 + $0xb8] sm:$0xff] %v401
  %437 = vst [vmem:[#allocation4 + $0xc0] sm:$0xff] %v332
  %438 = vst [vmem:[#allocation4 + $0xc8] sm:$0xff] %v334
  %439 = vst [vmem:[#allocation4 + $0xd0] sm:$0xff] %v405
  %440 = vst [vmem:[#allocation4 + $0xd8] sm:$0xff] %v407
  %441 = vst [vmem:[#allocation4 + $0xe0] sm:$0xff] %v336
  %442 = vst [vmem:[#allocation4 + $0xe8] sm:$0xff] %v338
  %443 = vst [vmem:[#allocation4 + $0xf0] sm:$0xff] %v409
  %444 = vst [vmem:[#allocation4 + $0xf8] sm:$0xff] %v411
  %v445 = vld [vmem:[%s2] sm:$0xff]
  %v446 = vld [vmem:[%s2 + $0x8] sm:$0xff]
  %v447 = vld [vmem:[%s2 + $0x10] sm:$0xff]
  %v448 = vld [vmem:[%s2 + $0x18] sm:$0xff]
  %v449 = vld [vmem:[%s2 + $0x20] sm:$0xff]
  %v450 = vld [vmem:[%s2 + $0x28] sm:$0xff]
  %v451 = vpack.c.bf16 %v446, %v445
  %v452 = vpack.c.bf16 %v448, %v447
  %v453 = vpack.c.bf16 %v450, %v449
  %v454 = vld [vmem:[%s7] sm:$0xff]
  %v455 = vld [vmem:[%s7 + $0x8] sm:$0xff]
  %v456 = vld [vmem:[%s7 + $0x10] sm:$0xff]
  %v457 = vld [vmem:[%s7 + $0x18] sm:$0xff]
  %v458 = vld [vmem:[%s7 + $0x20] sm:$0xff]
  %v459 = vld [vmem:[%s7 + $0x28] sm:$0xff]
  %v460 = vld [vmem:[%s7 + $0x30] sm:$0xff]
  %v461 = vld [vmem:[%s7 + $0x38] sm:$0xff]
  %v462 = vld [vmem:[%s7 + $0x40] sm:$0xff]
  %v463 = vld [vmem:[%s7 + $0x48] sm:$0xff]
  %v464 = vld [vmem:[%s7 + $0x50] sm:$0xff]
  %v465 = vld [vmem:[%s7 + $0x58] sm:$0xff]
  %v466 = vld [vmem:[%s7 + $0x60] sm:$0xff]
  %v467 = vld [vmem:[%s7 + $0x68] sm:$0xff]
  %v468 = vld [vmem:[%s7 + $0x70] sm:$0xff]
  %v469 = vld [vmem:[%s7 + $0x78] sm:$0xff]
  %v470 = vld [vmem:[%s7 + $0x80] sm:$0xff]
  %v471 = vld [vmem:[%s7 + $0x88] sm:$0xff]
  %v472 = vld [vmem:[%s7 + $0x90] sm:$0xff]
  %v473 = vld [vmem:[%s7 + $0x98] sm:$0xff]
  %v474 = vld [vmem:[%s7 + $0xa0] sm:$0xff]
  %v475 = vld [vmem:[%s7 + $0xa8] sm:$0xff]
  %v476 = vld [vmem:[%s7 + $0xb0] sm:$0xff]
  %v477 = vld [vmem:[%s7 + $0xb8] sm:$0xff]
  %v478 = vld [vmem:[%s7 + $0xc0] sm:$0xff]
  %v479 = vld [vmem:[%s7 + $0xc8] sm:$0xff]
  %v480 = vld [vmem:[%s7 + $0xd0] sm:$0xff]
  %v481 = vld [vmem:[%s7 + $0xd8] sm:$0xff]
  %v482 = vld [vmem:[%s7 + $0xe0] sm:$0xff]
  %v483 = vld [vmem:[%s7 + $0xe8] sm:$0xff]
  %v484 = vld [vmem:[%s7 + $0xf0] sm:$0xff]
  %v485 = vld [vmem:[%s7 + $0xf8] sm:$0xff]
  %v486 = vld [vmem:[%s9] sm:$0xf]
  %v488 = vlaneseq
  %v489 = vshrl.u32 %v488, 7
  %v490 = vsub.s32 0, %v489
  %v491 = vrot.slane %v486, %v490
  %v492 = vlaneseq
  %v493 = vshrl.u32 %v492, 7
  %v494 = vsub.s32 1, %v493
  %v495 = vrot.slane %v486, %v494
  %v496 = vlaneseq
  %v497 = vshrl.u32 %v496, 7
  %v498 = vsub.s32 2, %v497
  %v499 = vrot.slane %v486, %v498
  %v500 = vlaneseq
  %v501 = vshrl.u32 %v500, 7
  %v502 = vsub.s32 3, %v501
  %v503 = vrot.slane %v486, %v502
  %v540 = vunpack.c.l.b16 %v454
  %v541 = vunpack.c.h.b16 %v454
  %v542 = vunpack.c.l.b16 %v455
  %v543 = vunpack.c.h.b16 %v455
  %v544 = vunpack.c.l.b16 %v456
  %v545 = vunpack.c.h.b16 %v456
  %v546 = vunpack.c.l.b16 %v457
  %v547 = vunpack.c.h.b16 %v457
  %v548 = vunpack.c.l.b16 %v458
  %v549 = vunpack.c.h.b16 %v458
  %v550 = vunpack.c.l.b16 %v459
  %v551 = vunpack.c.h.b16 %v459
  %v552 = vunpack.c.l.b16 %v460
  %v553 = vunpack.c.h.b16 %v460
  %v554 = vunpack.c.l.b16 %v461
  %v555 = vunpack.c.h.b16 %v461
  %v556 = vunpack.c.l.b16 %v462
  %v557 = vunpack.c.h.b16 %v462
  %v558 = vunpack.c.l.b16 %v463
  %v559 = vunpack.c.h.b16 %v463
  %v560 = vunpack.c.l.b16 %v464
  %v561 = vunpack.c.h.b16 %v464
  %v562 = vunpack.c.l.b16 %v465
  %v563 = vunpack.c.h.b16 %v465
  %v564 = vunpack.c.l.b16 %v466
  %v565 = vunpack.c.h.b16 %v466
  %v566 = vunpack.c.l.b16 %v467
  %v567 = vunpack.c.h.b16 %v467
  %v568 = vunpack.c.l.b16 %v468
  %v569 = vunpack.c.h.b16 %v468
  %v570 = vunpack.c.l.b16 %v469
  %v571 = vunpack.c.h.b16 %v469
  %v572 = vunpack.c.l.b16 %v470
  %v573 = vunpack.c.h.b16 %v470
  %v574 = vunpack.c.l.b16 %v471
  %v575 = vunpack.c.h.b16 %v471
  %v576 = vunpack.c.l.b16 %v472
  %v577 = vunpack.c.h.b16 %v472
  %v578 = vunpack.c.l.b16 %v473
  %v579 = vunpack.c.h.b16 %v473
  %v580 = vunpack.c.l.b16 %v474
  %v581 = vunpack.c.h.b16 %v474
  %v582 = vunpack.c.l.b16 %v475
  %v583 = vunpack.c.h.b16 %v475
  %v584 = vunpack.c.l.b16 %v476
  %v585 = vunpack.c.h.b16 %v476
  %v586 = vunpack.c.l.b16 %v477
  %v587 = vunpack.c.h.b16 %v477
  %v588 = vunpack.c.l.b16 %v478
  %v589 = vunpack.c.h.b16 %v478
  %v590 = vunpack.c.l.b16 %v479
  %v591 = vunpack.c.h.b16 %v479
  %v592 = vunpack.c.l.b16 %v480
  %v593 = vunpack.c.h.b16 %v480
  %v594 = vunpack.c.l.b16 %v481
  %v595 = vunpack.c.h.b16 %v481
  %v596 = vunpack.c.l.b16 %v482
  %v597 = vunpack.c.h.b16 %v482
  %v598 = vunpack.c.l.b16 %v483
  %v599 = vunpack.c.h.b16 %v483
  %v600 = vunpack.c.l.b16 %v484
  %v601 = vunpack.c.h.b16 %v484
  %v602 = vunpack.c.l.b16 %v485
  %v603 = vunpack.c.h.b16 %v485
  %v604 = vpack.c.b16 %v544, %v540
  %v605 = vpack.c.b16 %v545, %v541
  %v606 = vpack.c.b16 %v546, %v542
  %v607 = vpack.c.b16 %v547, %v543
  %v608 = vpack.c.b16 %v552, %v548
  %v609 = vpack.c.b16 %v553, %v549
  %v610 = vpack.c.b16 %v554, %v550
  %v611 = vpack.c.b16 %v555, %v551
  %v612 = vpack.c.b16 %v560, %v556
  %v613 = vpack.c.b16 %v561, %v557
  %v614 = vpack.c.b16 %v562, %v558
  %v615 = vpack.c.b16 %v563, %v559
  %v616 = vpack.c.b16 %v568, %v564
  %v617 = vpack.c.b16 %v569, %v565
  %v618 = vpack.c.b16 %v570, %v566
  %v619 = vpack.c.b16 %v571, %v567
  %v620 = vpack.c.b16 %v576, %v572
  %v621 = vpack.c.b16 %v577, %v573
  %v622 = vpack.c.b16 %v578, %v574
  %v623 = vpack.c.b16 %v579, %v575
  %v624 = vpack.c.b16 %v584, %v580
  %v625 = vpack.c.b16 %v585, %v581
  %v626 = vpack.c.b16 %v586, %v582
  %v627 = vpack.c.b16 %v587, %v583
  %v628 = vpack.c.b16 %v592, %v588
  %v629 = vpack.c.b16 %v593, %v589
  %v630 = vpack.c.b16 %v594, %v590
  %v631 = vpack.c.b16 %v595, %v591
  %v632 = vpack.c.b16 %v600, %v596
  %v633 = vpack.c.b16 %v601, %v597
  %v634 = vpack.c.b16 %v602, %v598
  %v635 = vpack.c.b16 %v603, %v599
  %668 = vmatprep.subr.bf16.mxu0 %v605
  %669 = vmatpush1.bf16.msra.mxu0 %v604
  %670 = vmatprep.subr.bf16.mxu0 %v609
  %671 = vmatpush1.bf16.msra.mxu0 %v608
  %672 = vmatprep.subr.bf16.mxu0 %v613
  %673 = vmatpush1.bf16.msra.mxu0 %v612
  %674 = vmatprep.subr.bf16.mxu0 %v617
  %675 = vmatpush1.bf16.msra.mxu0 %v616
  %676 = vmatprep.subr.bf16.mxu0 %v621
  %677 = vmatpush1.bf16.msra.mxu0 %v620
  %678 = vmatprep.subr.bf16.mxu0 %v625
  %679 = vmatpush1.bf16.msra.mxu0 %v624
  %680 = vmatprep.subr.bf16.mxu0 %v629
  %681 = vmatpush1.bf16.msra.mxu0 %v628
  %682 = vmatprep.subr.bf16.mxu0 %v633
  %683 = vmatpush1.bf16.msra.mxu0 %v632
  %684 = vmatprep.subr.bf16.mxu0 0
  %685 = vmatpush1.bf16.msra.mxu0 0
  %686 = vmatprep.subr.bf16.mxu0 0
  %687 = vmatpush1.bf16.msra.mxu0 0
  %688 = vmatprep.subr.bf16.mxu0 0
  %689 = vmatpush1.bf16.msra.mxu0 0
  %690 = vmatprep.subr.bf16.mxu0 0
  %691 = vmatpush1.bf16.msra.mxu0 0
  %692 = vmatprep.subr.bf16.mxu0 0
  %693 = vmatpush1.bf16.msra.mxu0 0
  %694 = vmatprep.subr.bf16.mxu0 0
  %695 = vmatpush1.bf16.msra.mxu0 0
  %696 = vmatprep.subr.bf16.mxu0 0
  %697 = vmatpush1.bf16.msra.mxu0 0
  %698 = vmatprep.subr.bf16.mxu0 0
  %699 = vmatpush1.bf16.msra.mxu0 0
  %700 = vmatprep.mubr.bf16.mxu0 0
  %701 = vmatmul.mubr.bf16.gmra.mrb[0].mxu0 %v451
  %v702 = vpop.f32.mrb[0].mxu0
  %v703 = vadd.f32 %v491, %v702
  %v704 = vpop.f32.mrb[0].mxu0
  %v705 = vadd.f32 %v495, %v704
  %v706 = vpop.f32.mrb[0].mxu0
  %v707 = vadd.f32 %v491, %v706
  %v708 = vpop.f32.mrb[0].mxu0
  %v709 = vadd.f32 %v495, %v708
  %710 = vmatprep.mubr.bf16.mxu0 0
  %711 = vmatmul.mubr.bf16.gmra.mrb[0].mxu0 %v452
  %v712 = vpop.f32.mrb[0].mxu0
  %v713 = vadd.f32 %v491, %v712
  %v714 = vpop.f32.mrb[0].mxu0
  %v715 = vadd.f32 %v495, %v714
  %v716 = vpop.f32.mrb[0].mxu0
  %v717 = vadd.f32 %v491, %v716
  %v718 = vpop.f32.mrb[0].mxu0
  %v719 = vadd.f32 %v495, %v718
  %720 = vmatprep.mubr.bf16.mxu0 0
  %721 = vmatmul.mubr.bf16.gmra.mrb[0].mxu0 %v453
  %v722 = vpop.f32.mrb[0].mxu0
  %v723 = vadd.f32 %v491, %v722
  %v724 = vpop.f32.mrb[0].mxu0
  %v725 = vadd.f32 %v495, %v724
  %v726 = vpop.f32.mrb[0].mxu0
  %v727 = vadd.f32 %v491, %v726
  %v728 = vpop.f32.mrb[0].mxu0
  %v729 = vadd.f32 %v495, %v728
  %730 = vdwg.mxu0
  %731 = vmatprep.subr.bf16.mxu0 %v607
  %732 = vmatpush1.bf16.msra.mxu0 %v606
  %733 = vmatprep.subr.bf16.mxu0 %v611
  %734 = vmatpush1.bf16.msra.mxu0 %v610
  %735 = vmatprep.subr.bf16.mxu0 %v615
  %736 = vmatpush1.bf16.msra.mxu0 %v614
  %737 = vmatprep.subr.bf16.mxu0 %v619
  %738 = vmatpush1.bf16.msra.mxu0 %v618
  %739 = vmatprep.subr.bf16.mxu0 %v623
  %740 = vmatpush1.bf16.msra.mxu0 %v622
  %741 = vmatprep.subr.bf16.mxu0 %v627
  %742 = vmatpush1.bf16.msra.mxu0 %v626
  %743 = vmatprep.subr.bf16.mxu0 %v631
  %744 = vmatpush1.bf16.msra.mxu0 %v630
  %745 = vmatprep.subr.bf16.mxu0 %v635
  %746 = vmatpush1.bf16.msra.mxu0 %v634
  %747 = vmatprep.subr.bf16.mxu0 0
  %748 = vmatpush1.bf16.msra.mxu0 0
  %749 = vmatprep.subr.bf16.mxu0 0
  %750 = vmatpush1.bf16.msra.mxu0 0
  %751 = vmatprep.subr.bf16.mxu0 0
  %752 = vmatpush1.bf16.msra.mxu0 0
  %753 = vmatprep.subr.bf16.mxu0 0
  %754 = vmatpush1.bf16.msra.mxu0 0
  %755 = vmatprep.subr.bf16.mxu0 0
  %756 = vmatpush1.bf16.msra.mxu0 0
  %757 = vmatprep.subr.bf16.mxu0 0
  %758 = vmatpush1.bf16.msra.mxu0 0
  %759 = vmatprep.subr.bf16.mxu0 0
  %760 = vmatpush1.bf16.msra.mxu0 0
  %761 = vmatprep.subr.bf16.mxu0 0
  %762 = vmatpush1.bf16.msra.mxu0 0
  %763 = vmatprep.mubr.bf16.mxu0 0
  %764 = vmatmul.mubr.bf16.gmra.mrb[0].mxu0 %v451
  %v765 = vpop.f32.mrb[0].mxu0
  %v766 = vadd.f32 %v499, %v765
  %v767 = vpop.f32.mrb[0].mxu0
  %v768 = vadd.f32 %v503, %v767
  %v769 = vpop.f32.mrb[0].mxu0
  %v770 = vadd.f32 %v499, %v769
  %v771 = vpop.f32.mrb[0].mxu0
  %v772 = vadd.f32 %v503, %v771
  %773 = vmatprep.mubr.bf16.mxu0 0
  %774 = vmatmul.mubr.bf16.gmra.mrb[0].mxu0 %v452
  %v775 = vpop.f32.mrb[0].mxu0
  %v776 = vadd.f32 %v499, %v775
  %v777 = vpop.f32.mrb[0].mxu0
  %v778 = vadd.f32 %v503, %v777
  %v779 = vpop.f32.mrb[0].mxu0
  %v780 = vadd.f32 %v499, %v779
  %v781 = vpop.f32.mrb[0].mxu0
  %v782 = vadd.f32 %v503, %v781
  %783 = vmatprep.mubr.bf16.mxu0 0
  %784 = vmatmul.mubr.bf16.gmra.mrb[0].mxu0 %v453
  %v785 = vpop.f32.mrb[0].mxu0
  %v786 = vadd.f32 %v499, %v785
  %v787 = vpop.f32.mrb[0].mxu0
  %v788 = vadd.f32 %v503, %v787
  %v789 = vpop.f32.mrb[0].mxu0
  %v790 = vadd.f32 %v499, %v789
  %v791 = vpop.f32.mrb[0].mxu0
  %v792 = vadd.f32 %v503, %v791
  %793 = vdwg.mxu0
  %794 = vst [vmem:[#allocation5] sm:$0xff] %v703
  %795 = vst [vmem:[#allocation5 + $0x8] sm:$0xff] %v705
  %796 = vst [vmem:[#allocation5 + $0x10] sm:$0xff] %v766
  %797 = vst [vmem:[#allocation5 + $0x18] sm:$0xff] %v768
  %798 = vst [vmem:[#allocation5 + $0x20] sm:$0xff] %v707
  %799 = vst [vmem:[#allocation5 + $0x28] sm:$0xff] %v709
  %800 = vst [vmem:[#allocation5 + $0x30] sm:$0xff] %v770
  %801 = vst [vmem:[#allocation5 + $0x38] sm:$0xff] %v772
  %802 = vst [vmem:[#allocation5 + $0x40] sm:$0xff] %v713
  %803 = vst [vmem:[#allocation5 + $0x48] sm:$0xff] %v715
  %804 = vst [vmem:[#allocation5 + $0x50] sm:$0xff] %v776
  %805 = vst [vmem:[#allocation5 + $0x58] sm:$0xff] %v778
  %806 = vst [vmem:[#allocation5 + $0x60] sm:$0xff] %v717
  %807 = vst [vmem:[#allocation5 + $0x68] sm:$0xff] %v719
  %808 = vst [vmem:[#allocation5 + $0x70] sm:$0xff] %v780
  %809 = vst [vmem:[#allocation5 + $0x78] sm:$0xff] %v782
  %810 = vst [vmem:[#allocation5 + $0x80] sm:$0xff] %v723
  %811 = vst [vmem:[#allocation5 + $0x88] sm:$0xff] %v725
  %812 = vst [vmem:[#allocation5 + $0x90] sm:$0xff] %v786
  %813 = vst [vmem:[#allocation5 + $0x98] sm:$0xff] %v788
  %814 = vst [vmem:[#allocation5 + $0xa0] sm:$0xff] %v727
  %815 = vst [vmem:[#allocation5 + $0xa8] sm:$0xff] %v729
  %816 = vst [vmem:[#allocation5 + $0xb0] sm:$0xff] %v790
  %817 = vst [vmem:[#allocation5 + $0xb8] sm:$0xff] %v792
  %818 = vst [vmem:[#allocation2] sm:$0xff] 0.0
  %819 = vst [vmem:[#allocation2 + $0x8] sm:$0xff] 0.0
  %820 = vst [vmem:[#allocation2 + $0x10] sm:$0xff] 0.0
  %821 = vst [vmem:[#allocation2 + $0x18] sm:$0xff] 0.0
  %822 = vst [vmem:[#allocation2 + $0x20] sm:$0xff] 0.0
  %823 = vst [vmem:[#allocation2 + $0x28] sm:$0xff] 0.0
  %824 = vst [vmem:[#allocation2 + $0x30] sm:$0xff] 0.0
  %825 = vst [vmem:[#allocation2 + $0x38] sm:$0xff] 0.0
  %v826 = vld [vmem:[%s3] sm:$0xff]
  %s827 = sld [smem:[#allocation7]]
  // While loop
  $region46: #{seq2seq_forward.1} parent=0 // loop_pre_header
    _
  $region47: #{seq2seq_forward.1} parent=0 // loop_header
    %s829 = sphi 0, %s831
    %p830 = scmp.ge.s32.totalorder %s829, %s827
    %v834 = vphi 0.0, %v1163
    %v835 = vphi 0.0, %v1166
  $region48: #{seq2seq_forward.1} parent=0 // loop_header_branch
    %833 = sbr.rel (%p830) target = $region52
  $region49: #{seq2seq_forward.1} parent=0 // loop_body
    %s836 = smul.u32 %s829, 4
    %s837 = smul.addr %s836, 8
    %s838 = scalar_lea.vmem [#allocation4], %s837
    %v839 = vld [vmem:[%s838] sm:$0xff]
    %v840 = vld [vmem:[%s838 + $0x8] sm:$0xff]
    %v841 = vld [vmem:[%s838 + $0x10] sm:$0xff]
    %v842 = vld [vmem:[%s838 + $0x18] sm:$0xff]
    %v843 = vpack.c.bf16 %v834, %v834
    %v844 = vld [vmem:[%s5] sm:$0xff]
    %v845 = vld [vmem:[%s5 + $0x8] sm:$0xff]
    %v846 = vld [vmem:[%s5 + $0x10] sm:$0xff]
    %v847 = vld [vmem:[%s5 + $0x18] sm:$0xff]
    %v848 = vld [vmem:[%s5 + $0x20] sm:$0xff]
    %v849 = vld [vmem:[%s5 + $0x28] sm:$0xff]
    %v850 = vld [vmem:[%s5 + $0x30] sm:$0xff]
    %v851 = vld [vmem:[%s5 + $0x38] sm:$0xff]
    %v852 = vld [vmem:[%s5 + $0x40] sm:$0xff]
    %v853 = vld [vmem:[%s5 + $0x48] sm:$0xff]
    %v854 = vld [vmem:[%s5 + $0x50] sm:$0xff]
    %v855 = vld [vmem:[%s5 + $0x58] sm:$0xff]
    %v856 = vld [vmem:[%s5 + $0x60] sm:$0xff]
    %v857 = vld [vmem:[%s5 + $0x68] sm:$0xff]
    %v858 = vld [vmem:[%s5 + $0x70] sm:$0xff]
    %v859 = vld [vmem:[%s5 + $0x78] sm:$0xff]
    %v860 = vld [vmem:[%s5 + $0x80] sm:$0xff]
    %v861 = vld [vmem:[%s5 + $0x88] sm:$0xff]
    %v862 = vld [vmem:[%s5 + $0x90] sm:$0xff]
    %v863 = vld [vmem:[%s5 + $0x98] sm:$0xff]
    %v864 = vld [vmem:[%s5 + $0xa0] sm:$0xff]
    %v865 = vld [vmem:[%s5 + $0xa8] sm:$0xff]
    %v866 = vld [vmem:[%s5 + $0xb0] sm:$0xff]
    %v867 = vld [vmem:[%s5 + $0xb8] sm:$0xff]
    %v868 = vld [vmem:[%s5 + $0xc0] sm:$0xff]
    %v869 = vld [vmem:[%s5 + $0xc8] sm:$0xff]
    %v870 = vld [vmem:[%s5 + $0xd0] sm:$0xff]
    %v871 = vld [vmem:[%s5 + $0xd8] sm:$0xff]
    %v872 = vld [vmem:[%s5 + $0xe0] sm:$0xff]
    %v873 = vld [vmem:[%s5 + $0xe8] sm:$0xff]
    %v874 = vld [vmem:[%s5 + $0xf0] sm:$0xff]
    %v875 = vld [vmem:[%s5 + $0xf8] sm:$0xff]
    %v908 = vunpack.c.l.b16 %v844
    %v909 = vunpack.c.h.b16 %v844
    %v910 = vunpack.c.l.b16 %v845
    %v911 = vunpack.c.h.b16 %v845
    %v912 = vunpack.c.l.b16 %v846
    %v913 = vunpack.c.h.b16 %v846
    %v914 = vunpack.c.l.b16 %v847
    %v915 = vunpack.c.h.b16 %v847
    %v916 = vunpack.c.l.b16 %v848
    %v917 = vunpack.c.h.b16 %v848
    %v918 = vunpack.c.l.b16 %v849
    %v919 = vunpack.c.h.b16 %v849
    %v920 = vunpack.c.l.b16 %v850
    %v921 = vunpack.c.h.b16 %v850
    %v922 = vunpack.c.l.b16 %v851
    %v923 = vunpack.c.h.b16 %v851
    %v924 = vunpack.c.l.b16 %v852
    %v925 = vunpack.c.h.b16 %v852
    %v926 = vunpack.c.l.b16 %v853
    %v927 = vunpack.c.h.b16 %v853
    %v928 = vunpack.c.l.b16 %v854
    %v929 = vunpack.c.h.b16 %v854
    %v930 = vunpack.c.l.b16 %v855
    %v931 = vunpack.c.h.b16 %v855
    %v932 = vunpack.c.l.b16 %v856
    %v933 = vunpack.c.h.b16 %v856
    %v934 = vunpack.c.l.b16 %v857
    %v935 = vunpack.c.h.b16 %v857
    %v936 = vunpack.c.l.b16 %v858
    %v937 = vunpack.c.h.b16 %v858
    %v938 = vunpack.c.l.b16 %v859
    %v939 = vunpack.c.h.b16 %v859
    %v940 = vunpack.c.l.b16 %v860
    %v941 = vunpack.c.h.b16 %v860
    %v942 = vunpack.c.l.b16 %v861
    %v943 = vunpack.c.h.b16 %v861
    %v944 = vunpack.c.l.b16 %v862
    %v945 = vunpack.c.h.b16 %v862
    %v946 = vunpack.c.l.b16 %v863
    %v947 = vunpack.c.h.b16 %v863
    %v948 = vunpack.c.l.b16 %v864
    %v949 = vunpack.c.h.b16 %v864
    %v950 = vunpack.c.l.b16 %v865
    %v951 = vunpack.c.h.b16 %v865
    %v952 = vunpack.c.l.b16 %v866
    %v953 = vunpack.c.h.b16 %v866
    %v954 = vunpack.c.l.b16 %v867
    %v955 = vunpack.c.h.b16 %v867
    %v956 = vunpack.c.l.b16 %v868
    %v957 = vunpack.c.h.b16 %v868
    %v958 = vunpack.c.l.b16 %v869
    %v959 = vunpack.c.h.b16 %v869
    %v960 = vunpack.c.l.b16 %v870
    %v961 = vunpack.c.h.b16 %v870
    %v962 = vunpack.c.l.b16 %v871
    %v963 = vunpack.c.h.b16 %v871
    %v964 = vunpack.c.l.b16 %v872
    %v965 = vunpack.c.h.b16 %v872
    %v966 = vunpack.c.l.b16 %v873
    %v967 = vunpack.c.h.b16 %v873
    %v968 = vunpack.c.l.b16 %v874
    %v969 = vunpack.c.h.b16 %v874
    %v970 = vunpack.c.l.b16 %v875
    %v971 = vunpack.c.h.b16 %v875
    %v972 = vpack.c.b16 %v912, %v908
    %v973 = vpack.c.b16 %v913, %v909
    %v974 = vpack.c.b16 %v914, %v910
    %v975 = vpack.c.b16 %v915, %v911
    %v976 = vpack.c.b16 %v920, %v916
    %v977 = vpack.c.b16 %v921, %v917
    %v978 = vpack.c.b16 %v922, %v918
    %v979 = vpack.c.b16 %v923, %v919
    %v980 = vpack.c.b16 %v928, %v924
    %v981 = vpack.c.b16 %v929, %v925
    %v982 = vpack.c.b16 %v930, %v926
    %v983 = vpack.c.b16 %v931, %v927
    %v984 = vpack.c.b16 %v936, %v932
    %v985 = vpack.c.b16 %v937, %v933
    %v986 = vpack.c.b16 %v938, %v934
    %v987 = vpack.c.b16 %v939, %v935
    %v988 = vpack.c.b16 %v944, %v940
    %v989 = vpack.c.b16 %v945, %v941
    %v990 = vpack.c.b16 %v946, %v942
    %v991 = vpack.c.b16 %v947, %v943
    %v992 = vpack.c.b16 %v952, %v948
    %v993 = vpack.c.b16 %v953, %v949
    %v994 = vpack.c.b16 %v954, %v950
    %v995 = vpack.c.b16 %v955, %v951
    %v996 = vpack.c.b16 %v960, %v956
    %v997 = vpack.c.b16 %v961, %v957
    %v998 = vpack.c.b16 %v962, %v958
    %v999 = vpack.c.b16 %v963, %v959
    %v1000 = vpack.c.b16 %v968, %v964
    %v1001 = vpack.c.b16 %v969, %v965
    %v1002 = vpack.c.b16 %v970, %v966
    %v1003 = vpack.c.b16 %v971, %v967
    %1036 = vmatprep.subr.bf16.mxu0 %v973
    %1037 = vmatpush1.bf16.msra.mxu0 %v972
    %1038 = vmatprep.subr.bf16.mxu0 %v977
    %1039 = vmatpush1.bf16.msra.mxu0 %v976
    %1040 = vmatprep.subr.bf16.mxu0 %v981
    %1041 = vmatpush1.bf16.msra.mxu0 %v980
    %1042 = vmatprep.subr.bf16.mxu0 %v985
    %1043 = vmatpush1.bf16.msra.mxu0 %v984
    %1044 = vmatprep.subr.bf16.mxu0 %v989
    %1045 = vmatpush1.bf16.msra.mxu0 %v988
    %1046 = vmatprep.subr.bf16.mxu0 %v993
    %1047 = vmatpush1.bf16.msra.mxu0 %v992
    %1048 = vmatprep.subr.bf16.mxu0 %v997
    %1049 = vmatpush1.bf16.msra.mxu0 %v996
    %1050 = vmatprep.subr.bf16.mxu0 %v1001
    %1051 = vmatpush1.bf16.msra.mxu0 %v1000
    %1052 = vmatprep.subr.bf16.mxu0 0
    %1053 = vmatpush1.bf16.msra.mxu0 0
    %1054 = vmatprep.subr.bf16.mxu0 0
    %1055 = vmatpush1.bf16.msra.mxu0 0
    %1056 = vmatprep.subr.bf16.mxu0 0
    %1057 = vmatpush1.bf16.msra.mxu0 0
    %1058 = vmatprep.subr.bf16.mxu0 0
    %1059 = vmatpush1.bf16.msra.mxu0 0
    %1060 = vmatprep.subr.bf16.mxu0 0
    %1061 = vmatpush1.bf16.msra.mxu0 0
    %1062 = vmatprep.subr.bf16.mxu0 0
    %1063 = vmatpush1.bf16.msra.mxu0 0
    %1064 = vmatprep.subr.bf16.mxu0 0
    %1065 = vmatpush1.bf16.msra.mxu0 0
    %1066 = vmatprep.subr.bf16.mxu0 0
    %1067 = vmatpush1.bf16.msra.mxu0 0
    %1068 = vmatprep.mubr.bf16.mxu0 0
    %1069 = vmatmul.mubr.bf16.gmra.mrb[0].mxu0 %v843
    %v1070 = vpop.f32.mrb[0].mxu0
    %v1071 = vadd.f32 0.0, %v1070
    %v1072 = vpop.f32.mrb[0].mxu0
    %v1073 = vadd.f32 0.0, %v1072
    %v1074 = vpop.f32.mrb[0].mxu0
    %v1075 = vpop.f32.mrb[0].mxu0
    %1076 = vdwg.mxu0
    %1077 = vmatprep.subr.bf16.mxu0 %v975
    %1078 = vmatpush1.bf16.msra.mxu0 %v974
    %1079 = vmatprep.subr.bf16.mxu0 %v979
    %1080 = vmatpush1.bf16.msra.mxu0 %v978
    %1081 = vmatprep.subr.bf16.mxu0 %v983
    %1082 = vmatpush1.bf16.msra.mxu0 %v982
    %1083 = vmatprep.subr.bf16.mxu0 %v987
    %1084 = vmatpush1.bf16.msra.mxu0 %v986
    %1085 = vmatprep.subr.bf16.mxu0 %v991
    %1086 = vmatpush1.bf16.msra.mxu0 %v990
    %1087 = vmatprep.subr.bf16.mxu0 %v995
    %1088 = vmatpush1.bf16.msra.mxu0 %v994
    %1089 = vmatprep.subr.bf16.mxu0 %v999
    %1090 = vmatpush1.bf16.msra.mxu0 %v998
    %1091 = vmatprep.subr.bf16.mxu0 %v1003
    %1092 = vmatpush1.bf16.msra.mxu0 %v1002
    %1093 = vmatprep.subr.bf16.mxu0 0
    %1094 = vmatpush1.bf16.msra.mxu0 0
    %1095 = vmatprep.subr.bf16.mxu0 0
    %1096 = vmatpush1.bf16.msra.mxu0 0
    %1097 = vmatprep.subr.bf16.mxu0 0
    %1098 = vmatpush1.bf16.msra.mxu0 0
    %1099 = vmatprep.subr.bf16.mxu0 0
    %1100 = vmatpush1.bf16.msra.mxu0 0
    %1101 = vmatprep.subr.bf16.mxu0 0
    %1102 = vmatpush1.bf16.msra.mxu0 0
    %1103 = vmatprep.subr.bf16.mxu0 0
    %1104 = vmatpush1.bf16.msra.mxu0 0
    %1105 = vmatprep.subr.bf16.mxu0 0
    %1106 = vmatpush1.bf16.msra.mxu0 0
    %1107 = vmatprep.subr.bf16.mxu0 0
    %1108 = vmatpush1.bf16.msra.mxu0 0
    %1109 = vmatprep.mubr.bf16.mxu0 0
    %1110 = vmatmul.mubr.bf16.gmra.mrb[0].mxu0 %v843
    %v1111 = vpop.f32.mrb[0].mxu0
    %v1112 = vadd.f32 0.0, %v1111
    %v1113 = vpop.f32.mrb[0].mxu0
    %v1114 = vadd.f32 0.0, %v1113
    %v1115 = vpop.f32.mrb[0].mxu0
    %v1116 = vpop.f32.mrb[0].mxu0
    %1117 = vdwg.mxu0
    %v1118 = vadd.f32 %v839, %v1071
    %v1119 = vadd.f32 %v840, %v1073
    %v1120 = vadd.f32 %v841, %v1112
    %v1121 = vadd.f32 %v842, %v1114
    %v1122 = vxor.u32 %v1118, 2147483648
    %v1123 = vmul.f32 %v1122, 1.442695
    %v1124 = vpow.pop %v1123
    %v1125 = vadd.f32 %v1124, 1.0
    %v1126 = vrcp.pop %v1125
    %v1127 = vmul.f32 1.0, %v1126
    %v1128 = vxor.u32 %v1119, 2147483648
    %v1129 = vmul.f32 %v1128, 1.442695
    %v1130 = vpow.pop %v1129
    %v1131 = vadd.f32 %v1130, 1.0
    %v1132 = vrcp.pop %v1131
    %v1133 = vmul.f32 1.0, %v1132
    %v1134 = vtanh.pop %v1120
    %v1135 = vxor.u32 %v1121, 2147483648
    %v1136 = vmul.f32 %v1135, 1.442695
    %v1137 = vpow.pop %v1136
    %v1138 = vadd.f32 %v1137, 1.0
    %v1139 = vrcp.pop %v1138
    %v1140 = vmul.f32 1.0, %v1139
    %v1141 = vmul.f32 %v1133, %v835
    %v1142 = vmul.f32 %v1127, %v1134
    %v1143 = vadd.f32 %v1141, %v1142
    %v1144 = vtanh.pop %v1143
    %v1145 = vmul.f32 %v1140, %v1144
    %v1146 = vstv %s829
    %vm1147 = vcmp.lt.s32.totalorder %v1146, %v826
    %v1148 = vsel %vm1147, 1, 0
    %v1149 = vcvt.s32.f32 %v1148
    %1151 = vset.pattern.permute.xlu0 0
    %1152 = vperm.xlu0 %1151, %v1149
    %v1153 = vpop.permute.xlu0 %1152
    %v1155 = vmul.f32 %v1153, %v1145
    %v1156 = vsub.f32 1.0, %v1149
    %1158 = vset.pattern.permute.xlu0 0
    %1159 = vperm.xlu0 %1158, %v1156
    %v1160 = vpop.permute.xlu0 %1159
    %v1162 = vmul.f32 %v1160, %v834
    %v1163 = vadd.f32 %v1155, %v1162
    %v1164 = vmul.f32 %v1153, %v1143
    %v1165 = vmul.f32 %v1160, %v835
    %v1166 = vadd.f32 %v1164, %v1165
    %s1167 = smul.u32 %s829, 8
    %s1168 = scalar_lea.vmem [#allocation2], %s1167
    %1169 = vst [vmem:[%s1168] sm:$0xff] %v1155
  $region50: #{seq2seq_forward.1} parent=0 // loop_footer
    %s831 = sadd.s32 %s829, 1
  $region51: #{seq2seq_forward.1} parent=0 // loop_footer_branch
    %828 = sbr.rel target = $region47
  $region52: #{seq2seq_forward.1} parent=0 // loop_exit
    _
  %v1170 = vld [vmem:[#allocation2] sm:$0xff]
  %v1171 = vld [vmem:[#allocation2 + $0x8] sm:$0xff]
  %v1172 = vld [vmem:[#allocation2 + $0x10] sm:$0xff]
  %v1173 = vld [vmem:[#allocation2 + $0x18] sm:$0xff]
  %v1174 = vld [vmem:[#allocation2 + $0x20] sm:$0xff]
  %v1175 = vld [vmem:[#allocation2 + $0x28] sm:$0xff]
  %v1176 = vld [vmem:[#allocation2 + $0x30] sm:$0xff]
  %v1177 = vld [vmem:[#allocation2 + $0x38] sm:$0xff]
  %v1178 = vpack.c.bf16 %v1171, %v1170
  %v1179 = vpack.c.bf16 %v1173, %v1172
  %v1180 = vpack.c.bf16 %v1175, %v1174
  %v1181 = vpack.c.bf16 %v1177, %v1176
  %v1182 = vld [vmem:[%s10] sm:$0xf]
  %v1183 = vld [vmem:[%s10 + $0x4] sm:$0xf]
  %v1184 = vld [vmem:[%s10 + $0x8] sm:$0xf]
  %v1185 = vld [vmem:[%s10 + $0xc] sm:$0xf]
  %v1186 = vld [vmem:[%s10 + $0x10] sm:$0xf]
  %v1187 = vld [vmem:[%s10 + $0x14] sm:$0xf]
  %v1188 = vld [vmem:[%s10 + $0x18] sm:$0xf]
  %v1189 = vld [vmem:[%s10 + $0x1c] sm:$0xf]
  %v1190 = vld [vmem:[%s10 + $0x20] sm:$0xf]
  %v1191 = vld [vmem:[%s10 + $0x24] sm:$0xf]
  %v1192 = vld [vmem:[%s10 + $0x28] sm:$0xf]
  %v1193 = vld [vmem:[%s10 + $0x2c] sm:$0xf]
  %v1194 = vld [vmem:[%s10 + $0x30] sm:$0xf]
  %v1195 = vld [vmem:[%s10 + $0x34] sm:$0xf]
  %v1196 = vld [vmem:[%s10 + $0x38] sm:$0xf]
  %v1197 = vld [vmem:[%s10 + $0x3c] sm:$0xf]
  %v1214 = vunpack.c.l.b16 %v1182
  %v1215 = vunpack.c.l.b16 %v1183
  %v1216 = vunpack.c.l.b16 %v1184
  %v1217 = vunpack.c.l.b16 %v1185
  %v1218 = vunpack.c.l.b16 %v1186
  %v1219 = vunpack.c.l.b16 %v1187
  %v1220 = vunpack.c.l.b16 %v1188
  %v1221 = vunpack.c.l.b16 %v1189
  %v1222 = vunpack.c.l.b16 %v1190
  %v1223 = vunpack.c.l.b16 %v1191
  %v1224 = vunpack.c.l.b16 %v1192
  %v1225 = vunpack.c.l.b16 %v1193
  %v1226 = vunpack.c.l.b16 %v1194
  %v1227 = vunpack.c.l.b16 %v1195
  %v1228 = vunpack.c.l.b16 %v1196
  %v1229 = vunpack.c.l.b16 %v1197
  %v1230 = vpack.c.b16 %v1215, %v1214
  %v1231 = vpack.c.b16 %v1217, %v1216
  %v1232 = vpack.c.b16 %v1219, %v1218
  %v1233 = vpack.c.b16 %v1221, %v1220
  %v1234 = vpack.c.b16 %v1223, %v1222
  %v1235 = vpack.c.b16 %v1225, %v1224
  %v1236 = vpack.c.b16 %v1227, %v1226
  %v1237 = vpack.c.b16 %v1229, %v1228
  %1246 = vmatprep.subr.bf16.mxu0 0
  %1247 = vmatpush1.bf16.msra.mxu0 %v1230
  %1248 = vmatprep.subr.bf16.mxu0 0
  %1249 = vmatpush1.bf16.msra.mxu0 %v1231
  %1250 = vmatprep.subr.bf16.mxu0 0
  %1251 = vmatpush1.bf16.msra.mxu0 %v1232
  %1252 = vmatprep.subr.bf16.mxu0 0
  %1253 = vmatpush1.bf16.msra.mxu0 %v1233
  %1254 = vmatprep.subr.bf16.mxu0 0
  %1255 = vmatpush1.bf16.msra.mxu0 %v1234
  %1256 = vmatprep.subr.bf16.mxu0 0
  %1257 = vmatpush1.bf16.msra.mxu0 %v1235
  %1258 = vmatprep.subr.bf16.mxu0 0
  %1259 = vmatpush1.bf16.msra.mxu0 %v1236
  %1260 = vmatprep.subr.bf16.mxu0 0
  %1261 = vmatpush1.bf16.msra.mxu0 %v1237
  %1262 = vmatprep.subr.bf16.mxu0 0
  %1263 = vmatpush1.bf16.msra.mxu0 0
  %1264 = vmatprep.subr.bf16.mxu0 0
  %1265 = vmatpush1.bf16.msra.mxu0 0
  %1266 = vmatprep.subr.bf16.mxu0 0
  %1267 = vmatpush1.bf16.msra.mxu0 0
  %1268 = vmatprep.subr.bf16.mxu0 0
  %1269 = vmatpush1.bf16.msra.mxu0 0
  %1270 = vmatprep.subr.bf16.mxu0 0
  %1271 = vmatpush1.bf16.msra.mxu0 0
  %1272 = vmatprep.subr.bf16.mxu0 0
  %1273 = vmatpush1.bf16.msra.mxu0 0
  %1274 = vmatprep.subr.bf16.mxu0 0
  %1275 = vmatpush1.bf16.msra.mxu0 0
  %1276 = vmatprep.subr.bf16.mxu0 0
  %1277 = vmatpush1.bf16.msra.mxu0 0
  %1278 = vmatprep.mubr.bf16.mxu0 0
  %1279 = vmatmul.mubr.bf16.gmra.mrb[0].mxu0 %v1178
  %v1280 = vpop.f32.mrb[0].mxu0
  %v1281 = vadd.f32 0.0, %v1280
  %v1282 = vpop.f32.mrb[0].mxu0
  %v1283 = vpop.f32.mrb[0].mxu0
  %v1284 = vadd.f32 0.0, %v1283
  %v1285 = vpop.f32.mrb[0].mxu0
  %1286 = vmatprep.mubr.bf16.mxu0 0
  %1287 = vmatmul.mubr.bf16.gmra.mrb[0].mxu0 %v1179
  %v1288 = vpop.f32.mrb[0].mxu0
  %v1289 = vadd.f32 0.0, %v1288
  %v1290 = vpop.f32.mrb[0].mxu0
  %v1291 = vpop.f32.mrb[0].mxu0
  %v1292 = vadd.f32 0.0, %v1291
  %v1293 = vpop.f32.mrb[0].mxu0
  %1294 = vmatprep.mubr.bf16.mxu0 0
  %1295 = vmatmul.mubr.bf16.gmra.mrb[0].mxu0 %v1180
  %v1296 = vpop.f32.mrb[0].mxu0
  %v1297 = vadd.f32 0.0, %v1296
  %v1298 = vpop.f32.mrb[0].mxu0
  %v1299 = vpop.f32.mrb[0].mxu0
  %v1300 = vadd.f32 0.0, %v1299
  %v1301 = vpop.f32.mrb[0].mxu0
  %1302 = vmatprep.mubr.bf16.mxu0 0
  %1303 = vmatmul.mubr.bf16.gmra.mrb[0].mxu0 %v1181
  %v1304 = vpop.f32.mrb[0].mxu0
  %v1305 = vadd.f32 0.0, %v1304
  %v1306 = vpop.f32.mrb[0].mxu0
  %v1307 = vpop.f32.mrb[0].mxu0
  %v1308 = vadd.f32 0.0, %v1307
  %v1309 = vpop.f32.mrb[0].mxu0
  %1310 = vdwg.mxu0
  %1311 = vst [vmem:[#allocation3] sm:$0xff] %v1281
  %1312 = vst [vmem:[#allocation3 + $0x8] sm:$0xff] %v1284
  %1313 = vst [vmem:[#allocation3 + $0x10] sm:$0xff] %v1289
  %1314 = vst [vmem:[#allocation3 + $0x18] sm:$0xff] %v1292
  %1315 = vst [vmem:[#allocation3 + $0x20] sm:$0xff] %v1297
  %1316 = vst [vmem:[#allocation3 + $0x28] sm:$0xff] %v1300
  %1317 = vst [vmem:[#allocation3 + $0x30] sm:$0xff] %v1305
  %1318 = vst [vmem:[#allocation3 + $0x38] sm:$0xff] %v1308
  loop: start=0, step=1, limit=6
  $region53: #{seq2seq_forward.1} parent=0 // loop_pre_header
    _
  $region54: #{seq2seq_forward.1} parent=0 // loop_header
    %s1320 = sphi 0, %s1324
    %p1321 = scmp.ge.s32.totalorder %s1320, 6
    %v1325 = vphi %v834, %v1636
    %v1326 = vphi %v835, %v1634
  $region55: #{seq2seq_forward.1} parent=0 // loop_header_branch
    %1323 = sbr.rel (%p1321) target = $region59
  $region56: #{seq2seq_forward.1} parent=0 // loop_body
    %s1327 = smul.u32 %s1320, 4
    %s1328 = smul.addr %s1327, 8
    %s1329 = scalar_lea.vmem [#allocation5], %s1328
    %v1330 = vld [vmem:[%s1329] sm:$0xff]
    %v1331 = vld [vmem:[%s1329 + $0x8] sm:$0xff]
    %v1332 = vld [vmem:[%s1329 + $0x10] sm:$0xff]
    %v1333 = vld [vmem:[%s1329 + $0x18] sm:$0xff]
    %v1334 = vpack.c.bf16 %v1325, %v1325
    %v1335 = vld [vmem:[%s8] sm:$0xff]
    %v1336 = vld [vmem:[%s8 + $0x8] sm:$0xff]
    %v1337 = vld [vmem:[%s8 + $0x10] sm:$0xff]
    %v1338 = vld [vmem:[%s8 + $0x18] sm:$0xff]
    %v1339 = vld [vmem:[%s8 + $0x20] sm:$0xff]
    %v1340 = vld [vmem:[%s8 + $0x28] sm:$0xff]
    %v1341 = vld [vmem:[%s8 + $0x30] sm:$0xff]
    %v1342 = vld [vmem:[%s8 + $0x38] sm:$0xff]
    %v1343 = vld [vmem:[%s8 + $0x40] sm:$0xff]
    %v1344 = vld [vmem:[%s8 + $0x48] sm:$0xff]
    %v1345 = vld [vmem:[%s8 + $0x50] sm:$0xff]
    %v1346 = vld [vmem:[%s8 + $0x58] sm:$0xff]
    %v1347 = vld [vmem:[%s8 + $0x60] sm:$0xff]
    %v1348 = vld [vmem:[%s8 + $0x68] sm:$0xff]
    %v1349 = vld [vmem:[%s8 + $0x70] sm:$0xff]
    %v1350 = vld [vmem:[%s8 + $0x78] sm:$0xff]
    %v1351 = vld [vmem:[%s8 + $0x80] sm:$0xff]
    %v1352 = vld [vmem:[%s8 + $0x88] sm:$0xff]
    %v1353 = vld [vmem:[%s8 + $0x90] sm:$0xff]
    %v1354 = vld [vmem:[%s8 + $0x98] sm:$0xff]
    %v1355 = vld [vmem:[%s8 + $0xa0] sm:$0xff]
    %v1356 = vld [vmem:[%s8 + $0xa8] sm:$0xff]
    %v1357 = vld [vmem:[%s8 + $0xb0] sm:$0xff]
    %v1358 = vld [vmem:[%s8 + $0xb8] sm:$0xff]
    %v1359 = vld [vmem:[%s8 + $0xc0] sm:$0xff]
    %v1360 = vld [vmem:[%s8 + $0xc8] sm:$0xff]
    %v1361 = vld [vmem:[%s8 + $0xd0] sm:$0xff]
    %v1362 = vld [vmem:[%s8 + $0xd8] sm:$0xff]
    %v1363 = vld [vmem:[%s8 + $0xe0] sm:$0xff]
    %v1364 = vld [vmem:[%s8 + $0xe8] sm:$0xff]
    %v1365 = vld [vmem:[%s8 + $0xf0] sm:$0xff]
    %v1366 = vld [vmem:[%s8 + $0xf8] sm:$0xff]
    %v1399 = vunpack.c.l.b16 %v1335
    %v1400 = vunpack.c.h.b16 %v1335
    %v1401 = vunpack.c.l.b16 %v1336
    %v1402 = vunpack.c.h.b16 %v1336
    %v1403 = vunpack.c.l.b16 %v1337
    %v1404 = vunpack.c.h.b16 %v1337
    %v1405 = vunpack.c.l.b16 %v1338
    %v1406 = vunpack.c.h.b16 %v1338
    %v1407 = vunpack.c.l.b16 %v1339
    %v1408 = vunpack.c.h.b16 %v1339
    %v1409 = vunpack.c.l.b16 %v1340
    %v1410 = vunpack.c.h.b16 %v1340
    %v1411 = vunpack.c.l.b16 %v1341
    %v1412 = vunpack.c.h.b16 %v1341
    %v1413 = vunpack.c.l.b16 %v1342
    %v1414 = vunpack.c.h.b16 %v1342
    %v1415 = vunpack.c.l.b16 %v1343
    %v1416 = vunpack.c.h.b16 %v1343
    %v1417 = vunpack.c.l.b16 %v1344
    %v1418 = vunpack.c.h.b16 %v1344
    %v1419 = vunpack.c.l.b16 %v1345
    %v1420 = vunpack.c.h.b16 %v1345
    %v1421 = vunpack.c.l.b16 %v1346
    %v1422 = vunpack.c.h.b16 %v1346
    %v1423 = vunpack.c.l.b16 %v1347
    %v1424 = vunpack.c.h.b16 %v1347
    %v1425 = vunpack.c.l.b16 %v1348
    %v1426 = vunpack.c.h.b16 %v1348
    %v1427 = vunpack.c.l.b16 %v1349
    %v1428 = vunpack.c.h.b16 %v1349
    %v1429 = vunpack.c.l.b16 %v1350
    %v1430 = vunpack.c.h.b16 %v1350
    %v1431 = vunpack.c.l.b16 %v1351
    %v1432 = vunpack.c.h.b16 %v1351
    %v1433 = vunpack.c.l.b16 %v1352
    %v1434 = vunpack.c.h.b16 %v1352
    %v1435 = vunpack.c.l.b16 %v1353
    %v1436 = vunpack.c.h.b16 %v1353
    %v1437 = vunpack.c.l.b16 %v1354
    %v1438 = vunpack.c.h.b16 %v1354
    %v1439 = vunpack.c.l.b16 %v1355
    %v1440 = vunpack.c.h.b16 %v1355
    %v1441 = vunpack.c.l.b16 %v1356
    %v1442 = vunpack.c.h.b16 %v1356
    %v1443 = vunpack.c.l.b16 %v1357
    %v1444 = vunpack.c.h.b16 %v1357
    %v1445 = vunpack.c.l.b16 %v1358
    %v1446 = vunpack.c.h.b16 %v1358
    %v1447 = vunpack.c.l.b16 %v1359
    %v1448 = vunpack.c.h.b16 %v1359
    %v1449 = vunpack.c.l.b16 %v1360
    %v1450 = vunpack.c.h.b16 %v1360
    %v1451 = vunpack.c.l.b16 %v1361
    %v1452 = vunpack.c.h.b16 %v1361
    %v1453 = vunpack.c.l.b16 %v1362
    %v1454 = vunpack.c.h.b16 %v1362
    %v1455 = vunpack.c.l.b16 %v1363
    %v1456 = vunpack.c.h.b16 %v1363
    %v1457 = vunpack.c.l.b16 %v1364
    %v1458 = vunpack.c.h.b16 %v1364
    %v1459 = vunpack.c.l.b16 %v1365
    %v1460 = vunpack.c.h.b16 %v1365
    %v1461 = vunpack.c.l.b16 %v1366
    %v1462 = vunpack.c.h.b16 %v1366
    %v1463 = vpack.c.b16 %v1403, %v1399
    %v1464 = vpack.c.b16 %v1404, %v1400
    %v1465 = vpack.c.b16 %v1405, %v1401
    %v1466 = vpack.c.b16 %v1406, %v1402
    %v1467 = vpack.c.b16 %v1411, %v1407
    %v1468 = vpack.c.b16 %v1412, %v1408
    %v1469 = vpack.c.b16 %v1413, %v1409
    %v1470 = vpack.c.b16 %v1414, %v1410
    %v1471 = vpack.c.b16 %v1419, %v1415
    %v1472 = vpack.c.b16 %v1420, %v1416
    %v1473 = vpack.c.b16 %v1421, %v1417
    %v1474 = vpack.c.b16 %v1422, %v1418
    %v1475 = vpack.c.b16 %v1427, %v1423
    %v1476 = vpack.c.b16 %v1428, %v1424
    %v1477 = vpack.c.b16 %v1429, %v1425
    %v1478 = vpack.c.b16 %v1430, %v1426
    %v1479 = vpack.c.b16 %v1435, %v1431
    %v1480 = vpack.c.b16 %v1436, %v1432
    %v1481 = vpack.c.b16 %v1437, %v1433
    %v1482 = vpack.c.b16 %v1438, %v1434
    %v1483 = vpack.c.b16 %v1443, %v1439
    %v1484 = vpack.c.b16 %v1444, %v1440
    %v1485 = vpack.c.b16 %v1445, %v1441
    %v1486 = vpack.c.b16 %v1446, %v1442
    %v1487 = vpack.c.b16 %v1451, %v1447
    %v1488 = vpack.c.b16 %v1452, %v1448
    %v1489 = vpack.c.b16 %v1453, %v1449
    %v1490 = vpack.c.b16 %v1454, %v1450
    %v1491 = vpack.c.b16 %v1459, %v1455
    %v1492 = vpack.c.b16 %v1460, %v1456
    %v1493 = vpack.c.b16 %v1461, %v1457
    %v1494 = vpack.c.b16 %v1462, %v1458
    %1527 = vmatprep.subr.bf16.mxu0 %v1464
    %1528 = vmatpush1.bf16.msra.mxu0 %v1463
    %1529 = vmatprep.subr.bf16.mxu0 %v1468
    %1530 = vmatpush1.bf16.msra.mxu0 %v1467
    %1531 = vmatprep.subr.bf16.mxu0 %v1472
    %1532 = vmatpush1.bf16.msra.mxu0 %v1471
    %1533 = vmatprep.subr.bf16.mxu0 %v1476
    %1534 = vmatpush1.bf16.msra.mxu0 %v1475
    %1535 = vmatprep.subr.bf16.mxu0 %v1480
    %1536 = vmatpush1.bf16.msra.mxu0 %v1479
    %1537 = vmatprep.subr.bf16.mxu0 %v1484
    %1538 = vmatpush1.bf16.msra.mxu0 %v1483
    %1539 = vmatprep.subr.bf16.mxu0 %v1488
    %1540 = vmatpush1.bf16.msra.mxu0 %v1487
    %1541 = vmatprep.subr.bf16.mxu0 %v1492
    %1542 = vmatpush1.bf16.msra.mxu0 %v1491
    %1543 = vmatprep.subr.bf16.mxu0 0
    %1544 = vmatpush1.bf16.msra.mxu0 0
    %1545 = vmatprep.subr.bf16.mxu0 0
    %1546 = vmatpush1.bf16.msra.mxu0 0
    %1547 = vmatprep.subr.bf16.mxu0 0
    %1548 = vmatpush1.bf16.msra.mxu0 0
    %1549 = vmatprep.subr.bf16.mxu0 0
    %1550 = vmatpush1.bf16.msra.mxu0 0
    %1551 = vmatprep.subr.bf16.mxu0 0
    %1552 = vmatpush1.bf16.msra.mxu0 0
    %1553 = vmatprep.subr.bf16.mxu0 0
    %1554 = vmatpush1.bf16.msra.mxu0 0
    %1555 = vmatprep.subr.bf16.mxu0 0
    %1556 = vmatpush1.bf16.msra.mxu0 0
    %1557 = vmatprep.subr.bf16.mxu0 0
    %1558 = vmatpush1.bf16.msra.mxu0 0
    %1559 = vmatprep.mubr.bf16.mxu0 0
    %1560 = vmatmul.mubr.bf16.gmra.mrb[0].mxu0 %v1334
    %v1561 = vpop.f32.mrb[0].mxu0
    %v1562 = vadd.f32 0.0, %v1561
    %v1563 = vpop.f32.mrb[0].mxu0
    %v1564 = vadd.f32 0.0, %v1563
    %v1565 = vpop.f32.mrb[0].mxu0
    %v1566 = vpop.f32.mrb[0].mxu0
    %1567 = vdwg.mxu0
    %1568 = vmatprep.subr.bf16.mxu0 %v1466
    %1569 = vmatpush1.bf16.msra.mxu0 %v1465
    %1570 = vmatprep.subr.bf16.mxu0 %v1470
    %1571 = vmatpush1.bf16.msra.mxu0 %v1469
    %1572 = vmatprep.subr.bf16.mxu0 %v1474
    %1573 = vmatpush1.bf16.msra.mxu0 %v1473
    %1574 = vmatprep.subr.bf16.mxu0 %v1478
    %1575 = vmatpush1.bf16.msra.mxu0 %v1477
    %1576 = vmatprep.subr.bf16.mxu0 %v1482
    %1577 = vmatpush1.bf16.msra.mxu0 %v1481
    %1578 = vmatprep.subr.bf16.mxu0 %v1486
    %1579 = vmatpush1.bf16.msra.mxu0 %v1485
    %1580 = vmatprep.subr.bf16.mxu0 %v1490
    %1581 = vmatpush1.bf16.msra.mxu0 %v1489
    %1582 = vmatprep.subr.bf16.mxu0 %v1494
    %1583 = vmatpush1.bf16.msra.mxu0 %v1493
    %1584 = vmatprep.subr.bf16.mxu0 0
    %1585 = vmatpush1.bf16.msra.mxu0 0
    %1586 = vmatprep.subr.bf16.mxu0 0
    %1587 = vmatpush1.bf16.msra.mxu0 0
    %1588 = vmatprep.subr.bf16.mxu0 0
    %1589 = vmatpush1.bf16.msra.mxu0 0
    %1590 = vmatprep.subr.bf16.mxu0 0
    %1591 = vmatpush1.bf16.msra.mxu0 0
    %1592 = vmatprep.subr.bf16.mxu0 0
    %1593 = vmatpush1.bf16.msra.mxu0 0
    %1594 = vmatprep.subr.bf16.mxu0 0
    %1595 = vmatpush1.bf16.msra.mxu0 0
    %1596 = vmatprep.subr.bf16.mxu0 0
    %1597 = vmatpush1.bf16.msra.mxu0 0
    %1598 = vmatprep.subr.bf16.mxu0 0
    %1599 = vmatpush1.bf16.msra.mxu0 0
    %1600 = vmatprep.mubr.bf16.mxu0 0
    %1601 = vmatmul.mubr.bf16.gmra.mrb[0].mxu0 %v1334
    %v1602 = vpop.f32.mrb[0].mxu0
    %v1603 = vadd.f32 0.0, %v1602
    %v1604 = vpop.f32.mrb[0].mxu0
    %v1605 = vadd.f32 0.0, %v1604
    %v1606 = vpop.f32.mrb[0].mxu0
    %v1607 = vpop.f32.mrb[0].mxu0
    %1608 = vdwg.mxu0
    %v1609 = vadd.f32 %v1330, %v1562
    %v1610 = vadd.f32 %v1331, %v1564
    %v1611 = vadd.f32 %v1332, %v1603
    %v1612 = vadd.f32 %v1333, %v1605
    %v1613 = vxor.u32 %v1609, 2147483648
    %v1614 = vmul.f32 %v1613, 1.442695
    %v1615 = vpow.pop %v1614
    %v1616 = vadd.f32 %v1615, 1.0
    %v1617 = vrcp.pop %v1616
    %v1618 = vmul.f32 1.0, %v1617
    %v1619 = vxor.u32 %v1610, 2147483648
    %v1620 = vmul.f32 %v1619, 1.442695
    %v1621 = vpow.pop %v1620
    %v1622 = vadd.f32 %v1621, 1.0
    %v1623 = vrcp.pop %v1622
    %v1624 = vmul.f32 1.0, %v1623
    %v1625 = vtanh.pop %v1611
    %v1626 = vxor.u32 %v1612, 2147483648
    %v1627 = vmul.f32 %v1626, 1.442695
    %v1628 = vpow.pop %v1627
    %v1629 = vadd.f32 %v1628, 1.0
    %v1630 = vrcp.pop %v1629
    %v1631 = vmul.f32 1.0, %v1630
    %v1632 = vmul.f32 %v1624, %v1326
    %v1633 = vmul.f32 %v1618, %v1625
    %v1634 = vadd.f32 %v1632, %v1633
    %v1635 = vtanh.pop %v1634
    %v1636 = vmul.f32 %v1631, %v1635
    %v1637 = vld [vmem:[#allocation3] sm:$0xff]
    %v1638 = vld [vmem:[#allocation3 + $0x8] sm:$0xff]
    %v1639 = vld [vmem:[#allocation3 + $0x10] sm:$0xff]
    %v1640 = vld [vmem:[#allocation3 + $0x18] sm:$0xff]
    %v1641 = vld [vmem:[#allocation3 + $0x20] sm:$0xff]
    %v1642 = vld [vmem:[#allocation3 + $0x28] sm:$0xff]
    %v1643 = vld [vmem:[#allocation3 + $0x30] sm:$0xff]
    %v1644 = vld [vmem:[#allocation3 + $0x38] sm:$0xff]
    %v1645 = vmul.f32 %v1637, %v1636
    %v1646 = vmul.f32 %v1638, %v1636
    %v1647 = vmul.f32 %v1639, %v1636
    %v1648 = vmul.f32 %v1640, %v1636
    %v1649 = vmul.f32 %v1641, %v1636
    %v1650 = vmul.f32 %v1642, %v1636
    %v1651 = vmul.f32 %v1643, %v1636
    %v1652 = vmul.f32 %v1644, %v1636
    %1653 = vadd.xlane.f32.xlu0 %v1645
    %v1654 = vpop.xlane.xlu0 %1653
    %1655 = vadd.xlane.f32.xlu0 %v1646
    %v1656 = vpop.xlane.xlu0 %1655
    %1657 = vadd.xlane.f32.xlu0 %v1647
    %v1658 = vpop.xlane.xlu0 %1657
    %1659 = vadd.xlane.f32.xlu0 %v1648
    %v1660 = vpop.xlane.xlu0 %1659
    %1661 = vadd.xlane.f32.xlu0 %v1649
    %v1662 = vpop.xlane.xlu0 %1661
    %1663 = vadd.xlane.f32.xlu0 %v1650
    %v1664 = vpop.xlane.xlu0 %1663
    %1665 = vadd.xlane.f32.xlu0 %v1651
    %v1666 = vpop.xlane.xlu0 %1665
    %1667 = vadd.xlane.f32.xlu0 %v1652
    %v1668 = vpop.xlane.xlu0 %1667
    %v1669 = vlaneseq
    %v1670 = vand.u32 %v1669, 127
    %1671 = vset.pattern.permute.xlu0 0
    %1672 = vperm.xlu0 %1671, %v826
    %v1673 = vpop.permute.xlu0 %1672
    %vm1674 = vcmp.lt.s32.totalorder %v1670, %v1673
    %v1675 = vsel %vm1674, 0.0, -1e+30
    %v1684 = vlaneseq
    %v1685 = vshrl.u32 %v1684, 7
    %v1686 = vsub.s32 %v1670, %v1685
    %v1687 = vrot.slane %v1654, %v1686
    %v1688 = vlaneseq
    %v1689 = vshrl.u32 %v1688, 7
    %v1690 = vsub.s32 %v1670, %v1689
    %v1691 = vrot.slane %v1656, %v1690
    %v1692 = vlaneseq
    %v1693 = vshrl.u32 %v1692, 7
    %v1694 = vsub.s32 %v1670, %v1693
    %v1695 = vrot.slane %v1658, %v1694
    %v1696 = vlaneseq
    %v1697 = vshrl.u32 %v1696, 7
    %v1698 = vsub.s32 %v1670, %v1697
    %v1699 = vrot.slane %v1660, %v1698
    %v1700 = vlaneseq
    %v1701 = vshrl.u32 %v1700, 7
    %v1702 = vsub.s32 %v1670, %v1701
    %v1703 = vrot.slane %v1662, %v1702
    %v1704 = vlaneseq
    %v1705 = vshrl.u32 %v1704, 7
    %v1706 = vsub.s32 %v1670, %v1705
    %v1707 = vrot.slane %v1664, %v1706
    %v1708 = vlaneseq
    %v1709 = vshrl.u32 %v1708, 7
    %v1710 = vsub.s32 %v1670, %v1709
    %v1711 = vrot.slane %v1666, %v1710
    %v1712 = vlaneseq
    %v1713 = vshrl.u32 %v1712, 7
    %v1714 = vsub.s32 %v1670, %v1713
    %v1715 = vrot.slane %v1668, %v1714
    %vm1716 = vcmask 1041409
    %v1717 = vsel %vm1716, %v1691, %v1687
    %vm1718 = vcmask 1042434
    %v1719 = vsel %vm1718, %v1695, %v1717
    %vm1720 = vcmask 1043459
    %v1721 = vsel %vm1720, %v1699, %v1719
    %vm1722 = vcmask 1044484
    %v1723 = vsel %vm1722, %v1703, %v1721
    %vm1724 = vcmask 1045509
    %v1725 = vsel %vm1724, %v1707, %v1723
    %vm1726 = vcmask 1046534
    %v1727 = vsel %vm1726, %v1711, %v1725
    %vm1728 = vcmask 1047559
    %v1729 = vsel %vm1728, %v1715, %v1727
    %1731 = vxpose.xlu0.b32.start [1/16] %v1729, 128
    %1732 = vxpose.xlu0.b32.cont [2/16] 0.0, 128
    %1733 = vxpose.xlu0.b32.cont [3/16] 0.0, 128
    %1734 = vxpose.xlu0.b32.cont [4/16] 0.0, 128
    %1735 = vxpose.xlu0.b32.cont [5/16] 0.0, 128
    %1736 = vxpose.xlu0.b32.cont [6/16] 0.0, 128
    %1737 = vxpose.xlu0.b32.cont [7/16] 0.0, 128
    %1738 = vxpose.xlu0.b32.cont [8/16] 0.0, 128
    %1739 = vxpose.xlu0.b32.cont [9/16] 0.0, 128
    %1740 = vxpose.xlu0.b32.cont [10/16] 0.0, 128
    %1741 = vxpose.xlu0.b32.cont [11/16] 0.0, 128
    %1742 = vxpose.xlu0.b32.cont [12/16] 0.0, 128
    %1743 = vxpose.xlu0.b32.cont [13/16] 0.0, 128
    %1744 = vxpose.xlu0.b32.cont [14/16] 0.0, 128
    %1745 = vxpose.xlu0.b32.cont [15/16] 0.0, 128
    %1746 = vxpose.xlu0.b32.end [16/16] 0.0, 128
    %v1747 = vpop.trf.xlu0
    %v1748 = vpop.trf.xlu0
    %v1749 = vpop.trf.xlu0
    %v1750 = vpop.trf.xlu0
    %v1751 = vpop.trf.xlu0
    %v1752 = vpop.trf.xlu0
    %v1753 = vpop.trf.xlu0
    %v1754 = vpop.trf.xlu0
    %v1755 = vpop.trf.xlu0
    %v1756 = vpop.trf.xlu0
    %v1757 = vpop.trf.xlu0
    %v1758 = vpop.trf.xlu0
    %v1759 = vpop.trf.xlu0
    %v1760 = vpop.trf.xlu0
    %v1761 = vpop.trf.xlu0
    %v1762 = vpop.trf.xlu0
    %v1763 = vadd.f32 %v1747, %v1675
    %vm1764 = vcmask 64512
    %v1765 = vsel %vm1764, %v1763, -inf
    %1766 = vmax.xlane.f32.xlu0 %v1765
    %v1767 = vpop.xlane.xlu0 %1766
    %v1768 = vsub.f32 %v1763, %v1767
    %v1769 = vmul.f32 %v1768, 1.442695
    %v1770 = vpow.pop %v1769
    %v1771 = vsel %vm1764, %v1770, 0.0
    %1772 = vadd.xlane.f32.xlu0 %v1771
    %v1773 = vpop.xlane.xlu0 %1772
    %v1774 = vrcp.pop %v1773
    %v1775 = vmul.f32 %v1770, %v1774
    %v1776 = vld [vmem:[#allocation2] sm:$0xff]
    %v1777 = vld [vmem:[#allocation2 + $0x8] sm:$0xff]
    %v1778 = vld [vmem:[#allocation2 + $0x10] sm:$0xff]
    %v1779 = vld [vmem:[#allocation2 + $0x18] sm:$0xff]
    %v1780 = vld [vmem:[#allocation2 + $0x20] sm:$0xff]
    %v1781 = vld [vmem:[#allocation2 + $0x28] sm:$0xff]
    %v1782 = vld [vmem:[#allocation2 + $0x30] sm:$0xff]
    %v1783 = vld [vmem:[#allocation2 + $0x38] sm:$0xff]
    %1784 = vxpose.xlu0.b32.start [1/16] %v1775, 128
    %1785 = vxpose.xlu0.b32.cont [2/16] 0.0, 128
    %1786 = vxpose.xlu0.b32.cont [3/16] 0.0, 128
    %1787 = vxpose.xlu0.b32.cont [4/16] 0.0, 128
    %1788 = vxpose.xlu0.b32.cont [5/16] 0.0, 128
    %1789 = vxpose.xlu0.b32.cont [6/16] 0.0, 128
    %1790 = vxpose.xlu0.b32.cont [7/16] 0.0, 128
    %1791 = vxpose.xlu0.b32.cont [8/16] 0.0, 128
    %1792 = vxpose.xlu0.b32.cont [9/16] 0.0, 128
    %1793 = vxpose.xlu0.b32.cont [10/16] 0.0, 128
    %1794 = vxpose.xlu0.b32.cont [11/16] 0.0, 128
    %1795 = vxpose.xlu0.b32.cont [12/16] 0.0, 128
    %1796 = vxpose.xlu0.b32.cont [13/16] 0.0, 128
    %1797 = vxpose.xlu0.b32.cont [14/16] 0.0, 128
    %1798 = vxpose.xlu0.b32.cont [15/16] 0.0, 128
    %1799 = vxpose.xlu0.b32.end [16/16] 0.0, 128
    %v1800 = vpop.trf.xlu0
    %v1801 = vpop.trf.xlu0
    %v1802 = vpop.trf.xlu0
    %v1803 = vpop.trf.xlu0
    %v1804 = vpop.trf.xlu0
    %v1805 = vpop.trf.xlu0
    %v1806 = vpop.trf.xlu0
    %v1807 = vpop.trf.xlu0
    %v1808 = vpop.trf.xlu0
    %v1809 = vpop.trf.xlu0
    %v1810 = vpop.trf.xlu0
    %v1811 = vpop.trf.xlu0
    %v1812 = vpop.trf.xlu0
    %v1813 = vpop.trf.xlu0
    %v1814 = vpop.trf.xlu0
    %v1815 = vpop.trf.xlu0
    %v1816 = vlaneseq
    %v1817 = vshrl.u32 %v1816, 7
    %v1818 = vsub.s32 0, %v1817
    %v1819 = vrot.slane %v1800, %v1818
    %1821 = vbcast.lane.b32.xlu0 %v1819, 256
    %v1822 = vpop.permute.xlu0 %1821
    %v1823 = vlaneseq
    %v1824 = vshrl.u32 %v1823, 7
    %v1825 = vsub.s32 1, %v1824
    %v1826 = vrot.slane %v1800, %v1825
    %1828 = vbcast.lane.b32.xlu0 %v1826, 256
    %v1829 = vpop.permute.xlu0 %1828
    %v1830 = vlaneseq
    %v1831 = vshrl.u32 %v1830, 7
    %v1832 = vsub.s32 2, %v1831
    %v1833 = vrot.slane %v1800, %v1832
    %1835 = vbcast.lane.b32.xlu0 %v1833, 256
    %v1836 = vpop.permute.xlu0 %1835
    %v1837 = vlaneseq
    %v1838 = vshrl.u32 %v1837, 7
    %v1839 = vsub.s32 3, %v1838
    %v1840 = vrot.slane %v1800, %v1839
    %1842 = vbcast.lane.b32.xlu0 %v1840, 256
    %v1843 = vpop.permute.xlu0 %1842
    %v1844 = vlaneseq
    %v1845 = vshrl.u32 %v1844, 7
    %v1846 = vsub.s32 4, %v1845
    %v1847 = vrot.slane %v1800, %v1846
    %1849 = vbcast.lane.b32.xlu0 %v1847, 256
    %v1850 = vpop.permute.xlu0 %1849
    %v1851 = vlaneseq
    %v1852 = vshrl.u32 %v1851, 7
    %v1853 = vsub.s32 5, %v1852
    %v1854 = vrot.slane %v1800, %v1853
    %1856 = vbcast.lane.b32.xlu0 %v1854, 256
    %v1857 = vpop.permute.xlu0 %1856
    %v1858 = vlaneseq
    %v1859 = vshrl.u32 %v1858, 7
    %v1860 = vsub.s32 6, %v1859
    %v1861 = vrot.slane %v1800, %v1860
    %1863 = vbcast.lane.b32.xlu0 %v1861, 256
    %v1864 = vpop.permute.xlu0 %1863
    %v1865 = vlaneseq
    %v1866 = vshrl.u32 %v1865, 7
    %v1867 = vsub.s32 7, %v1866
    %v1868 = vrot.slane %v1800, %v1867
    %1870 = vbcast.lane.b32.xlu0 %v1868, 256
    %v1871 = vpop.permute.xlu0 %1870
    %v1872 = vmul.f32 %v1776, %v1822
    %v1873 = vmul.f32 %v1777, %v1829
    %v1874 = vmul.f32 %v1778, %v1836
    %v1875 = vmul.f32 %v1779, %v1843
    %v1876 = vmul.f32 %v1780, %v1850
    %v1877 = vmul.f32 %v1781, %v1857
    %v1878 = vmul.f32 %v1782, %v1864
    %v1879 = vmul.f32 %v1783, %v1871
    %v1880 = vadd.f32 %v1872, %v1873
    %v1881 = vadd.f32 %v1880, %v1874
    %v1882 = vadd.f32 %v1881, %v1875
    %v1883 = vadd.f32 %v1882, %v1876
    %v1884 = vadd.f32 %v1883, %v1877
    %v1885 = vadd.f32 %v1884, %v1878
    %v1886 = vadd.f32 %v1885, %v1879
    %v1887 = vpack.c.bf16 %v1886, %v1886
    %v1888 = vpack.c.bf16 %v1636, %v1636
    %v1889 = vld [vmem:[%s11] sm:$0xf]
    %v1890 = vld [vmem:[%s11 + $0x4] sm:$0xf]
    %v1891 = vld [vmem:[%s11 + $0x8] sm:$0xf]
    %v1892 = vld [vmem:[%s11 + $0xc] sm:$0xf]
    %v1893 = vld [vmem:[%s11 + $0x10] sm:$0xf]
    %v1894 = vld [vmem:[%s11 + $0x14] sm:$0xf]
    %v1895 = vld [vmem:[%s11 + $0x18] sm:$0xf]
    %v1896 = vld [vmem:[%s11 + $0x1c] sm:$0xf]
    %v1897 = vld [vmem:[%s11 + $0x20] sm:$0xf]
    %v1898 = vld [vmem:[%s11 + $0x24] sm:$0xf]
    %v1899 = vld [vmem:[%s11 + $0x28] sm:$0xf]
    %v1900 = vld [vmem:[%s11 + $0x2c] sm:$0xf]
    %v1901 = vld [vmem:[%s11 + $0x30] sm:$0xf]
    %v1902 = vld [vmem:[%s11 + $0x34] sm:$0xf]
    %v1903 = vld [vmem:[%s11 + $0x38] sm:$0xf]
    %v1904 = vld [vmem:[%s11 + $0x3c] sm:$0xf]
    %v1905 = vld [vmem:[%s11 + $0x40] sm:$0xf]
    %v1906 = vld [vmem:[%s11 + $0x44] sm:$0xf]
    %v1907 = vld [vmem:[%s11 + $0x48] sm:$0xf]
    %v1908 = vld [vmem:[%s11 + $0x4c] sm:$0xf]
    %v1909 = vld [vmem:[%s11 + $0x50] sm:$0xf]
    %v1910 = vld [vmem:[%s11 + $0x54] sm:$0xf]
    %v1911 = vld [vmem:[%s11 + $0x58] sm:$0xf]
    %v1912 = vld [vmem:[%s11 + $0x5c] sm:$0xf]
    %v1913 = vld [vmem:[%s11 + $0x60] sm:$0xf]
    %v1914 = vld [vmem:[%s11 + $0x64] sm:$0xf]
    %v1915 = vld [vmem:[%s11 + $0x68] sm:$0xf]
    %v1916 = vld [vmem:[%s11 + $0x6c] sm:$0xf]
    %v1917 = vld [vmem:[%s11 + $0x70] sm:$0xf]
    %v1918 = vld [vmem:[%s11 + $0x74] sm:$0xf]
    %v1919 = vld [vmem:[%s11 + $0x78] sm:$0xf]
    %v1920 = vld [vmem:[%s11 + $0x7c] sm:$0xf]
    %v1953 = vunpack.c.l.b16 %v1889
    %v1954 = vunpack.c.l.b16 %v1890
    %v1955 = vunpack.c.l.b16 %v1891
    %v1956 = vunpack.c.l.b16 %v1892
    %v1957 = vunpack.c.l.b16 %v1893
    %v1958 = vunpack.c.l.b16 %v1894
    %v1959 = vunpack.c.l.b16 %v1895
    %v1960 = vunpack.c.l.b16 %v1896
    %v1961 = vunpack.c.l.b16 %v1897
    %v1962 = vunpack.c.l.b16 %v1898
    %v1963 = vunpack.c.l.b16 %v1899
    %v1964 = vunpack.c.l.b16 %v1900
    %v1965 = vunpack.c.l.b16 %v1901
    %v1966 = vunpack.c.l.b16 %v1902
    %v1967 = vunpack.c.l.b16 %v1903
    %v1968 = vunpack.c.l.b16 %v1904
    %v1969 = vunpack.c.l.b16 %v1905
    %v1970 = vunpack.c.l.b16 %v1906
    %v1971 = vunpack.c.l.b16 %v1907
    %v1972 = vunpack.c.l.b16 %v1908
    %v1973 = vunpack.c.l.b16 %v1909
    %v1974 = vunpack.c.l.b16 %v1910
    %v1975 = vunpack.c.l.b16 %v1911
    %v1976 = vunpack.c.l.b16 %v1912
    %v1977 = vunpack.c.l.b16 %v1913
    %v1978 = vunpack.c.l.b16 %v1914
    %v1979 = vunpack.c.l.b16 %v1915
    %v1980 = vunpack.c.l.b16 %v1916
    %v1981 = vunpack.c.l.b16 %v1917
    %v1982 = vunpack.c.l.b16 %v1918
    %v1983 = vunpack.c.l.b16 %v1919
    %v1984 = vunpack.c.l.b16 %v1920
    %v1985 = vpack.c.b16 %v1954, %v1953
    %v1986 = vpack.c.b16 %v1956, %v1955
    %v1987 = vpack.c.b16 %v1958, %v1957
    %v1988 = vpack.c.b16 %v1960, %v1959
    %v1989 = vpack.c.b16 %v1962, %v1961
    %v1990 = vpack.c.b16 %v1964, %v1963
    %v1991 = vpack.c.b16 %v1966, %v1965
    %v1992 = vpack.c.b16 %v1968, %v1967
    %v1993 = vpack.c.b16 %v1970, %v1969
    %v1994 = vpack.c.b16 %v1972, %v1971
    %v1995 = vpack.c.b16 %v1974, %v1973
    %v1996 = vpack.c.b16 %v1976, %v1975
    %v1997 = vpack.c.b16 %v1978, %v1977
    %v1998 = vpack.c.b16 %v1980, %v1979
    %v1999 = vpack.c.b16 %v1982, %v1981
    %v2000 = vpack.c.b16 %v1984, %v1983
    %2017 = vmatprep.subr.bf16.mxu0 0
    %2018 = vmatpush1.bf16.msra.mxu0 %v1985
    %2019 = vmatprep.subr.bf16.mxu0 0
    %2020 = vmatpush1.bf16.msra.mxu0 %v1986
    %2021 = vmatprep.subr.bf16.mxu0 0
    %2022 = vmatpush1.bf16.msra.mxu0 %v1987
    %2023 = vmatprep.subr.bf16.mxu0 0
    %2024 = vmatpush1.bf16.msra.mxu0 %v1988
    %2025 = vmatprep.subr.bf16.mxu0 0
    %2026 = vmatpush1.bf16.msra.mxu0 %v1989
    %2027 = vmatprep.subr.bf16.mxu0 0
    %2028 = vmatpush1.bf16.msra.mxu0 %v1990
    %2029 = vmatprep.subr.bf16.mxu0 0
    %2030 = vmatpush1.bf16.msra.mxu0 %v1991
    %2031 = vmatprep.subr.bf16.mxu0 0
    %2032 = vmatpush1.bf16.msra.mxu0 %v1992
    %2033 = vmatprep.subr.bf16.mxu0 0
    %2034 = vmatpush1.bf16.msra.mxu0 %v1993
    %2035 = vmatprep.subr.bf16.mxu0 0
    %2036 = vmatpush1.bf16.msra.mxu0 %v1994
    %2037 = vmatprep.subr.bf16.mxu0 0
    %2038 = vmatpush1.bf16.msra.mxu0 %v1995
    %2039 = vmatprep.subr.bf16.mxu0 0
    %2040 = vmatpush1.bf16.msra.mxu0 %v1996
    %2041 = vmatprep.subr.bf16.mxu0 0
    %2042 = vmatpush1.bf16.msra.mxu0 %v1997
    %2043 = vmatprep.subr.bf16.mxu0 0
    %2044 = vmatpush1.bf16.msra.mxu0 %v1998
    %2045 = vmatprep.subr.bf16.mxu0 0
    %2046 = vmatpush1.bf16.msra.mxu0 %v1999
    %2047 = vmatprep.subr.bf16.mxu0 0
    %2048 = vmatpush1.bf16.msra.mxu0 %v2000
    %2049 = vmatprep.mubr.bf16.mxu0 %v1888
    %2050 = vmatmul.mubr.bf16.gmra.mrb[0].mxu0 %v1887
    %v2051 = vpop.f32.mrb[0].mxu0
    %v2052 = vadd.f32 0.0, %v2051
    %v2053 = vpop.f32.mrb[0].mxu0
    %v2054 = vpop.f32.mrb[0].mxu0
    %v2055 = vpop.f32.mrb[0].mxu0
    %2056 = vdwg.mxu0
    %v2057 = vtanh.pop %v2052
    %s2058 = smul.u32 %s1320, 8
    %s2059 = scalar_lea.vmem %s12, %s2058
    %2060 = vst [vmem:[%s2059] sm:$0xff] %v2057
  $region57: #{seq2seq_forward.1} parent=0 // loop_footer
    %s1324 = sadd.s32 1, %s1320
  $region58: #{seq2seq_forward.1} parent=0 // loop_footer_branch
    %1319 = sbr.rel target = $region54
  $region59: #{seq2seq_forward.1} parent=0 // loop_exit
    _
  // Predicated region
  $region60: #{seq2seq_forward.1} parent=0 // pred_check
    _
  $region61: #{seq2seq_forward.1} parent=0 // pred_check_branch
    %2062 = sbr.rel (0) target = $region63
  $region62: #{seq2seq_forward.1} parent=0 // pred_region
    _
  $region63: #{seq2seq_forward.1} parent=0 // pred_fallthru
    _
  // Predicated region
  $region64: #{seq2seq_forward.1} parent=0 // pred_check
    _
  $region65: #{seq2seq_forward.1} parent=0 // pred_check_branch
    %2064 = sbr.rel (0) target = $region67
  $region66: #{seq2seq_forward.1} parent=0 // pred_region
    _
  $region67: #{seq2seq_forward.1} parent=0 // pred_fallthru
    _

</llo_original>
